<compile_context>
chip_gen: v7x
topology: tpu7x:2x2x1
jax: 0.10.0
libtpu: 0.0.40
codegen_flags: <defaults>
</compile_context>

<pallas_src>
import functools
import math

import jax
import jax.numpy as jnp
from jax.experimental import pallas as pl
from jax.experimental.pallas import tpu as pltpu


def _fault_attention_kernel(xpad_ref, wconv_ref, bconv_ref, wqkv_ref, bqkv_ref,
                            wo3_ref, bo_ref, gamma_ref, beta_ref,
                            o_ref, qkv_sc, *,
                            seq_len, num_heads, head_dim, window_size, top_k, eps):
    S = seq_len
    nh, hd = num_heads, head_dim
    hw = window_size // 2
    n_taps = wconv_ref.shape[0]

    xpad = xpad_ref[0]                                    # (S + n_taps - 1, Din)

    # ---- multi-scale Conv1d (3 convs fused into 7 taps) + ReLU ---------------
    acc = jnp.dot(xpad[0:S, :], wconv_ref[0], preferred_element_type=jnp.float32)
    for j in range(1, n_taps):
        acc = acc + jnp.dot(xpad[j:j + S, :], wconv_ref[j],
                            preferred_element_type=jnp.float32)
    xc = jnp.maximum(acc + bconv_ref[...], 0.0)           # (S, H) f32

    # ---- fused Q/K/V projection: a single (S,H)x(H,3H) MXU matmul ------------
    qkv = jnp.dot(xc, wqkv_ref[...],
                  preferred_element_type=jnp.float32) + bqkv_ref[...]   # (S, 3H)

    # Relayout once to a head-major (nh, S, 3*hd) VMEM scratch (wrapper already
    # grouped the columns per head as [q_h | k_h | v_h]) so everything below is
    # batched over heads -- no per-head lane slicing or head concatenation.
    w3 = 3 * hd
    for h in range(nh):
        qkv_sc[h] = qkv[:, h * w3:(h + 1) * w3]
    q3 = qkv_sc[:, :, 0:hd]              # (nh, S, hd); already scaled by 1/sqrt(hd)
    k3 = qkv_sc[:, :, hd:2 * hd]
    v3 = qkv_sc[:, :, 2 * hd:3 * hd]

    # ---- global sparse (top-k) attention, batched over heads -----------------
    # contract directly on the feature axis (no materialized k.T); scale is
    # already folded into Q, so these are the final scores.
    scores = jax.lax.dot_general(q3, k3, (((2,), (2,)), ((0,), (0,))),
                                 preferred_element_type=jnp.float32)    # (nh,S,S)

    # torch.topk(k) + softmax + gather  ==  keep-top-k mask + row softmax + matmul.
    # The k-th largest score per row is found by peeling extrema from the cheaper
    # side: drop the (S - top_k) smallest when that needs fewer XLU reductions
    # than peeling the top_k largest (exact ties are measure-zero for floats).
    n_drop = S - top_k
    work = scores
    if n_drop < top_k:
        for _ in range(n_drop):
            low = jnp.min(work, axis=-1, keepdims=True)   # (nh, S, 1)
            work = jnp.where(work <= low, jnp.inf, work)
        kth = jnp.min(work, axis=-1, keepdims=True)       # k-th largest
    else:
        for _ in range(top_k):
            kth = jnp.max(work, axis=-1, keepdims=True)   # k-th largest (last iter)
            work = jnp.where(work >= kth, -jnp.inf, work)
    masked = jnp.where(scores >= kth, scores, -jnp.inf)
    m = jnp.max(masked, axis=-1, keepdims=True)
    e = jnp.exp(masked - m)                               # zeros outside the top-k
    # fold the 0.5 branch-averaging into the (nh,S,1) reciprocal (EUP slot)
    inv_half = 0.5 * pl.reciprocal(jnp.sum(e, axis=-1, keepdims=True), approx=True)

    # ---- local branch ---------------------------------------------------------
    # The torch einsum broadcasts local_weights' singleton dim against local_V's
    # window dim, so local_out == window_sum(V) (the softmax weights sum to 1 and
    # factor out).  Express it as a banded (S,S) {0.5, 0} matrix so it fuses with
    # the sparse softmax weights into one batched MXU matmul.
    row = jax.lax.broadcasted_iota(jnp.int32, (S, S), 0)
    col = jax.lax.broadcasted_iota(jnp.int32, (S, S), 1)
    half_band = jnp.where(jnp.abs(row - col) <= hw, 0.5, 0.0).astype(jnp.float32)

    w_comb = e * inv_half + half_band[None, :, :]         # (nh, S, S)

    # value path in bf16 (f32 accumulation); selection was already fixed in f32.
    out3 = jax.lax.dot_general(w_comb.astype(jnp.bfloat16),
                               v3.astype(jnp.bfloat16),
                               (((2,), (1,)), ((0,), (0,))),
                               preferred_element_type=jnp.float32)      # (nh,S,hd)

    # ---- output projection: sum_h out3[h] @ Wo_t[h] == concat(heads) @ Wo.T ---
    proj = jax.lax.dot_general(out3.astype(jnp.bfloat16), wo3_ref[...],
                               (((2,), (1,)), ((0,), (0,))),
                               preferred_element_type=jnp.float32)      # (nh,S,H)
    out = jnp.sum(proj, axis=0) + bo_ref[...]             # (S, H)

    # ---- residual + LayerNorm over the feature dim ----------------------------
    z = out + xc
    mu = jnp.mean(z, axis=-1, keepdims=True)
    zc = z - mu
    var = jnp.mean(zc * zc, axis=-1, keepdims=True)
    y = zc * jax.lax.rsqrt(var + eps) * gamma_ref[...] + beta_ref[...]
    o_ref[0] = y


def _prep_params(params, *, num_heads):
    """Pre-arrange PyTorch-layout weights for the kernel (all relayout / transpose
    / scale-folding work happens once here, outside the kernel)."""
    (w1, b1, w2, b2, w3c, b3,
     wq, bq, wk, bk, wv, bv, wo, bo, gamma, beta) = params
    Din = w1.shape[1]
    H = wq.shape[0]
    hd = H // num_heads
    scale = 1.0 / math.sqrt(hd)

    # Fuse the three Conv1d's (k=3/5/7, equivalent zero padding) into one 7-tap
    # weight (n_taps, Din, H); output channels keep the torch concat order.
    n_taps = max(w.shape[-1] for w in (w1, w2, w3c))
    w_taps = jnp.zeros((n_taps, Din, H), jnp.float32)
    biases = []
    c0 = 0
    for w, b in ((w1, b1), (w2, b2), (w3c, b3)):
        C, _, K = w.shape
        off = (n_taps - K) // 2
        w_taps = w_taps.at[off:off + K, :, c0:c0 + C].set(jnp.transpose(w, (2, 1, 0)))
        biases.append(b)
        c0 += C
    b_conv = jnp.concatenate(biases).reshape(1, H)

    # Fused, pre-transposed, head-major QKV weight: columns are
    # [q_h0 | k_h0 | v_h0 | q_h1 | k_h1 | v_h1 | ...], each hd wide.
    # The 1/sqrt(head_dim) score scale is folded into the Q columns/bias (Q only
    # feeds the global scores after the local-branch simplification) so the
    # kernel never scales the (nh,S,S) score tensor.
    wqt, wkt, wvt = wq.T * scale, wk.T, wv.T              # (H_in, H_out)
    bqs = bq * scale
    wblk, bblk = [], []
    for h in range(num_heads):
        sl = slice(h * hd, (h + 1) * hd)
        wblk += [wqt[:, sl], wkt[:, sl], wvt[:, sl]]
        bblk += [bqs[sl], bk[sl], bv[sl]]
    w_qkv = jnp.concatenate(wblk, axis=1)                 # (H, 3H)
    b_qkv = jnp.concatenate(bblk).reshape(1, 3 * H)

    # Output projection, pre-transposed and split per head: (nh, hd, H), bf16
    # (halves its DMA; the in-kernel matmul still accumulates in f32).
    wo3 = wo.T.reshape(num_heads, hd, H).astype(jnp.bfloat16)

    return (w_taps, b_conv, w_qkv, b_qkv, wo3,
            bo.reshape(1, H), gamma.reshape(1, H), beta.reshape(1, H))


def fault_attention(x, params, *, num_heads, window_size, top_k, eps=1e-5):
    """x: (B, S, Din) f32 -> (B, S, hidden_dim) f32.  Whole forward in one kernel."""
    B, S, Din = x.shape
    H = params[6].shape[0]                                # wq: (H, H)
    hd = H // num_heads
    assert S >= top_k, "torch.topk(top_k) requires seq_len >= top_k"

    (w_taps, b_conv, w_qkv, b_qkv, wo3, bo2, gamma2, beta2) = _prep_params(
        params, num_heads=num_heads)

    n_taps = w_taps.shape[0]
    pad = n_taps // 2
    x_pad = jnp.pad(x, ((0, 0), (pad, pad), (0, 0)))      # zero pad == conv padding

    def full(a):
        return pl.BlockSpec(a.shape, lambda b: (0,) * a.ndim)

    kernel = functools.partial(
        _fault_attention_kernel,
        seq_len=S, num_heads=num_heads, head_dim=hd,
        window_size=window_size, top_k=top_k, eps=eps)

    return pl.pallas_call(
        kernel,
        out_shape=jax.ShapeDtypeStruct((B, S, H), jnp.float32),
        grid_spec=pltpu.PrefetchScalarGridSpec(
            num_scalar_prefetch=0,
            grid=(B,),
            in_specs=[
                pl.BlockSpec((1, S + 2 * pad, Din), lambda b: (b, 0, 0)),  # x_pad
                full(w_taps), full(b_conv),
                full(w_qkv), full(b_qkv),
                full(wo3), full(bo2), full(gamma2), full(beta2),
            ],
            out_specs=pl.BlockSpec((1, S, H), lambda b: (b, 0, 0)),
            scratch_shapes=[pltpu.VMEM((num_heads, S, 3 * hd), jnp.float32)],
        ),
        # grid=(B,) "parallel": uses both v7x TensorCores; on v5e/v6e the second
        # step only adds ~0.35us of per-step overhead at these shapes.
        compiler_params=pltpu.CompilerParams(
            dimension_semantics=("parallel",)),
    )(x_pad, w_taps, b_conv, w_qkv, b_qkv, wo3, bo2, gamma2, beta2)


def _reference(x, params, *, num_heads, window_size, top_k, eps=1e-5):
    """Pure-JAX mirror of the PyTorch forward, for validation."""
    (w1, b1, w2, b2, w3c, b3,
     wq, bq, wk, bk, wv, bv, wo, bo, gamma, beta) = params
    B, S, _ = x.shape
    H = wq.shape[0]
    hd = H // num_heads
    hw = window_size // 2

    def conv1d(w, b):                                     # w: (C, Din, K), b: (C,)
        C, _, K = w.shape
        p = K // 2
        xp = jnp.pad(x, ((0, 0), (p, p), (0, 0)))
        out = b[None, None, :]
        for t in range(K):
            out = out + jnp.einsum("bsi,ci->bsc", xp[:, t:t + S, :], w[:, :, t])
        return out

    xc = jnp.concatenate([jax.nn.relu(conv1d(w1, b1)),
                          jax.nn.relu(conv1d(w2, b2)),
                          jax.nn.relu(conv1d(w3c, b3))], axis=-1)       # (B,S,H)

    def heads(w, b):
        return (xc @ w.T + b).reshape(B, S, num_heads, hd).transpose(0, 2, 1, 3)

    Q, K_, V = heads(wq, bq), heads(wk, bk), heads(wv, bv)              # (B,nh,S,hd)

    # local branch: the torch einsum broadcasts local_weights' singleton dim
    # against local_V's window dim -> local_out == zero-padded window-sum of V.
    Vp = jnp.pad(V, ((0, 0), (0, 0), (hw, hw), (0, 0)))
    local = sum(Vp[:, :, d:d + S, :] for d in range(window_size))

    scores = jnp.einsum("bhqd,bhkd->bhqk", Q, K_) / math.sqrt(hd)
    tk_vals, tk_idx = jax.lax.top_k(scores, top_k)                      # (B,nh,S,k)
    tk_w = jax.nn.softmax(tk_vals, axis=-1)
    onehot = jax.nn.one_hot(tk_idx, S, dtype=scores.dtype)              # (B,nh,S,k,S)
    tk_V = jnp.einsum("bhnts,bhsd->bhntd", onehot, V)
    sparse = jnp.einsum("bhnt,bhntd->bhnd", tk_w, tk_V)

    out = (local + sparse) / 2
    out = out.transpose(0, 2, 1, 3).reshape(B, S, H)
    out = out @ wo.T + bo
    z = out + xc
    mu = z.mean(-1, keepdims=True)
    var = ((z - mu) ** 2).mean(-1, keepdims=True)
    return (z - mu) / jnp.sqrt(var + eps) * gamma + beta


if __name__ == "__main__":
    # Shapes implied by the module defaults: seq_len must be >= top_k (=10) for
    # torch.topk, so S=16; hidden_dim=32 with num_heads=4 -> head_dim=8.
    B, S = 2, 16
    input_dim, hidden_dim = 24, 32
    num_heads, window_size, top_k = 4, 5, 10

    key = jax.random.PRNGKey(0)
    ks = jax.random.split(key, 18)

    def init_linear(kw, kb, out_f, in_f):
        bound = 1.0 / math.sqrt(in_f)
        w = jax.random.uniform(kw, (out_f, in_f), jnp.float32, -bound, bound)
        b = jax.random.uniform(kb, (out_f,), jnp.float32, -bound, bound)
        return w, b

    def init_conv(kw, kb, out_c, in_c, ksz):
        bound = 1.0 / math.sqrt(in_c * ksz)
        w = jax.random.uniform(kw, (out_c, in_c, ksz), jnp.float32, -bound, bound)
        b = jax.random.uniform(kb, (out_c,), jnp.float32, -bound, bound)
        return w, b

    base = hidden_dim // 3
    rem = hidden_dim % 3
    w1, b1 = init_conv(ks[0], ks[1], base + (1 if rem > 0 else 0), input_dim, 3)
    w2, b2 = init_conv(ks[2], ks[3], base + (1 if rem > 1 else 0), input_dim, 5)
    w3c, b3 = init_conv(ks[4], ks[5], base, input_dim, 7)
    wq, bq = init_linear(ks[6], ks[7], hidden_dim, hidden_dim)
    wk, bk = init_linear(ks[8], ks[9], hidden_dim, hidden_dim)
    wv, bv = init_linear(ks[10], ks[11], hidden_dim, hidden_dim)
    wo, bo = init_linear(ks[12], ks[13], hidden_dim, hidden_dim)
    # LayerNorm affine: perturb away from the (1, 0) init so the path is exercised.
    gamma = 1.0 + 0.1 * jax.random.normal(ks[14], (hidden_dim,), jnp.float32)
    beta = 0.1 * jax.random.normal(ks[15], (hidden_dim,), jnp.float32)

    params = (w1, b1, w2, b2, w3c, b3, wq, bq, wk, bk, wv, bv, wo, bo, gamma, beta)

    x = jax.random.normal(ks[16], (B, S, input_dim), jnp.float32)

    out = fault_attention(x, params, num_heads=num_heads,
                          window_size=window_size, top_k=top_k)
    out = jax.block_until_ready(out)

    ref = _reference(x, params, num_heads=num_heads,
                     window_size=window_size, top_k=top_k)
    assert out.shape == (B, S, hidden_dim)
    err = float(jnp.max(jnp.abs(out - ref)))
    # bf16 value-path operands -> ~1e-2-scale agreement expected.
    assert jnp.allclose(out, ref, atol=2e-2, rtol=2e-2), \
        f"mismatch vs reference: max|diff|={err}"
    print("KERNEL_OK")
</pallas_src>

<mosaic_0001>
module attributes {stable_mosaic.version = 11 : i64} {
  func.func @_fault_attention_kernel(%arg0: i32, %arg1: memref<1x22x24xf32, #tpu.memory_space<vmem>>, %arg2: memref<7x24x32xf32, #tpu.memory_space<vmem>>, %arg3: memref<1x32xf32, #tpu.memory_space<vmem>>, %arg4: memref<32x96xf32, #tpu.memory_space<vmem>>, %arg5: memref<1x96xf32, #tpu.memory_space<vmem>>, %arg6: memref<4x8x32xbf16, #tpu.memory_space<vmem>>, %arg7: memref<1x32xf32, #tpu.memory_space<vmem>>, %arg8: memref<1x32xf32, #tpu.memory_space<vmem>>, %arg9: memref<1x32xf32, #tpu.memory_space<vmem>>, %arg10: memref<1x16x32xf32, #tpu.memory_space<vmem>>, %arg11: memref<4x16x24xf32, #tpu.memory_space<vmem>>) attributes {dimension_semantics = [#tpu.dimension_semantics<parallel>], iteration_bounds = array<i64: 2>, scalar_prefetch = 0 : i64, scratch_operands = 1 : i64, tpu.core_type = #tpu.core_type<tc>, window_params = [{transform_indices = @transform_0, window_bounds = array<i64: 1, 22, 24>}, {pipeline_mode = #tpu.pipeline_mode<synchronous>, transform_indices = @transform_1, window_bounds = array<i64: 7, 24, 32>}, {pipeline_mode = #tpu.pipeline_mode<synchronous>, transform_indices = @transform_2, window_bounds = array<i64: 1, 32>}, {pipeline_mode = #tpu.pipeline_mode<synchronous>, transform_indices = @transform_3, window_bounds = array<i64: 32, 96>}, {pipeline_mode = #tpu.pipeline_mode<synchronous>, transform_indices = @transform_4, window_bounds = array<i64: 1, 96>}, {pipeline_mode = #tpu.pipeline_mode<synchronous>, transform_indices = @transform_5, window_bounds = array<i64: 4, 8, 32>}, {pipeline_mode = #tpu.pipeline_mode<synchronous>, transform_indices = @transform_6, window_bounds = array<i64: 1, 32>}, {pipeline_mode = #tpu.pipeline_mode<synchronous>, transform_indices = @transform_7, window_bounds = array<i64: 1, 32>}, {pipeline_mode = #tpu.pipeline_mode<synchronous>, transform_indices = @transform_8, window_bounds = array<i64: 1, 32>}, {transform_indices = @transform_9, window_bounds = array<i64: 1, 16, 32>}]} {
    %c0 = arith.constant 0 : index
    %c0_0 = arith.constant 0 : index
    %c0_1 = arith.constant 0 : index
    %0 = vector.load %arg1[%c0, %c0_0, %c0_1] : memref<1x22x24xf32, #tpu.memory_space<vmem>>, vector<1x22x24xf32>
    %1 = vector.shape_cast %0 : vector<1x22x24xf32> to vector<22x24xf32>
    %2 = vector.extract_strided_slice %1 {offsets = [0, 0], sizes = [16, 24], strides = [1, 1]} : vector<22x24xf32> to vector<16x24xf32>
    %c0_2 = arith.constant 0 : index
    %c0_3 = arith.constant 0 : index
    %c0_4 = arith.constant 0 : index
    %3 = vector.load %arg2[%c0_2, %c0_3, %c0_4] : memref<7x24x32xf32, #tpu.memory_space<vmem>>, vector<1x24x32xf32>
    %4 = vector.shape_cast %3 : vector<1x24x32xf32> to vector<24x32xf32>
    %cst = arith.constant dense<0.000000e+00> : vector<16x32xf32>
    %5 = tpu.matmul %2, %4, %cst {dimension_numbers = #tpu.dot_dimension_numbers<[1], [0], [0], [1], [0, 0, 1, 1], [], []>} : vector<16x24xf32>, vector<24x32xf32>, vector<16x32xf32> -> vector<16x32xf32>
    %6 = vector.extract_strided_slice %1 {offsets = [1, 0], sizes = [16, 24], strides = [1, 1]} : vector<22x24xf32> to vector<16x24xf32>
    %c1 = arith.constant 1 : index
    %c0_5 = arith.constant 0 : index
    %c0_6 = arith.constant 0 : index
    %7 = vector.load %arg2[%c1, %c0_5, %c0_6] : memref<7x24x32xf32, #tpu.memory_space<vmem>>, vector<1x24x32xf32>
    %8 = vector.shape_cast %7 : vector<1x24x32xf32> to vector<24x32xf32>
    %cst_7 = arith.constant dense<0.000000e+00> : vector<16x32xf32>
    %9 = tpu.matmul %6, %8, %cst_7 {dimension_numbers = #tpu.dot_dimension_numbers<[1], [0], [0], [1], [0, 0, 1, 1], [], []>} : vector<16x24xf32>, vector<24x32xf32>, vector<16x32xf32> -> vector<16x32xf32>
    %10 = arith.addf %5, %9 : vector<16x32xf32>
    %11 = vector.extract_strided_slice %1 {offsets = [2, 0], sizes = [16, 24], strides = [1, 1]} : vector<22x24xf32> to vector<16x24xf32>
    %c2 = arith.constant 2 : index
    %c0_8 = arith.constant 0 : index
    %c0_9 = arith.constant 0 : index
    %12 = vector.load %arg2[%c2, %c0_8, %c0_9] : memref<7x24x32xf32, #tpu.memory_space<vmem>>, vector<1x24x32xf32>
    %13 = vector.shape_cast %12 : vector<1x24x32xf32> to vector<24x32xf32>
    %cst_10 = arith.constant dense<0.000000e+00> : vector<16x32xf32>
    %14 = tpu.matmul %11, %13, %cst_10 {dimension_numbers = #tpu.dot_dimension_numbers<[1], [0], [0], [1], [0, 0, 1, 1], [], []>} : vector<16x24xf32>, vector<24x32xf32>, vector<16x32xf32> -> vector<16x32xf32>
    %15 = arith.addf %10, %14 : vector<16x32xf32>
    %16 = vector.extract_strided_slice %1 {offsets = [3, 0], sizes = [16, 24], strides = [1, 1]} : vector<22x24xf32> to vector<16x24xf32>
    %c3 = arith.constant 3 : index
    %c0_11 = arith.constant 0 : index
    %c0_12 = arith.constant 0 : index
    %17 = vector.load %arg2[%c3, %c0_11, %c0_12] : memref<7x24x32xf32, #tpu.memory_space<vmem>>, vector<1x24x32xf32>
    %18 = vector.shape_cast %17 : vector<1x24x32xf32> to vector<24x32xf32>
    %cst_13 = arith.constant dense<0.000000e+00> : vector<16x32xf32>
    %19 = tpu.matmul %16, %18, %cst_13 {dimension_numbers = #tpu.dot_dimension_numbers<[1], [0], [0], [1], [0, 0, 1, 1], [], []>} : vector<16x24xf32>, vector<24x32xf32>, vector<16x32xf32> -> vector<16x32xf32>
    %20 = arith.addf %15, %19 : vector<16x32xf32>
    %21 = vector.extract_strided_slice %1 {offsets = [4, 0], sizes = [16, 24], strides = [1, 1]} : vector<22x24xf32> to vector<16x24xf32>
    %c4 = arith.constant 4 : index
    %c0_14 = arith.constant 0 : index
    %c0_15 = arith.constant 0 : index
    %22 = vector.load %arg2[%c4, %c0_14, %c0_15] : memref<7x24x32xf32, #tpu.memory_space<vmem>>, vector<1x24x32xf32>
    %23 = vector.shape_cast %22 : vector<1x24x32xf32> to vector<24x32xf32>
    %cst_16 = arith.constant dense<0.000000e+00> : vector<16x32xf32>
    %24 = tpu.matmul %21, %23, %cst_16 {dimension_numbers = #tpu.dot_dimension_numbers<[1], [0], [0], [1], [0, 0, 1, 1], [], []>} : vector<16x24xf32>, vector<24x32xf32>, vector<16x32xf32> -> vector<16x32xf32>
    %25 = arith.addf %20, %24 : vector<16x32xf32>
    %26 = vector.extract_strided_slice %1 {offsets = [5, 0], sizes = [16, 24], strides = [1, 1]} : vector<22x24xf32> to vector<16x24xf32>
    %c5 = arith.constant 5 : index
    %c0_17 = arith.constant 0 : index
    %c0_18 = arith.constant 0 : index
    %27 = vector.load %arg2[%c5, %c0_17, %c0_18] : memref<7x24x32xf32, #tpu.memory_space<vmem>>, vector<1x24x32xf32>
    %28 = vector.shape_cast %27 : vector<1x24x32xf32> to vector<24x32xf32>
    %cst_19 = arith.constant dense<0.000000e+00> : vector<16x32xf32>
    %29 = tpu.matmul %26, %28, %cst_19 {dimension_numbers = #tpu.dot_dimension_numbers<[1], [0], [0], [1], [0, 0, 1, 1], [], []>} : vector<16x24xf32>, vector<24x32xf32>, vector<16x32xf32> -> vector<16x32xf32>
    %30 = arith.addf %25, %29 : vector<16x32xf32>
    %31 = vector.extract_strided_slice %1 {offsets = [6, 0], sizes = [16, 24], strides = [1, 1]} : vector<22x24xf32> to vector<16x24xf32>
    %c6 = arith.constant 6 : index
    %c0_20 = arith.constant 0 : index
    %c0_21 = arith.constant 0 : index
    %32 = vector.load %arg2[%c6, %c0_20, %c0_21] : memref<7x24x32xf32, #tpu.memory_space<vmem>>, vector<1x24x32xf32>
    %33 = vector.shape_cast %32 : vector<1x24x32xf32> to vector<24x32xf32>
    %cst_22 = arith.constant dense<0.000000e+00> : vector<16x32xf32>
    %34 = tpu.matmul %31, %33, %cst_22 {dimension_numbers = #tpu.dot_dimension_numbers<[1], [0], [0], [1], [0, 0, 1, 1], [], []>} : vector<16x24xf32>, vector<24x32xf32>, vector<16x32xf32> -> vector<16x32xf32>
    %35 = arith.addf %30, %34 : vector<16x32xf32>
    %c0_23 = arith.constant 0 : index
    %c0_24 = arith.constant 0 : index
    %36 = vector.load %arg3[%c0_23, %c0_24] : memref<1x32xf32, #tpu.memory_space<vmem>>, vector<1x32xf32>
    %37 = vector.broadcast %36 : vector<1x32xf32> to vector<16x32xf32>
    %38 = arith.addf %35, %37 : vector<16x32xf32>
    %cst_25 = arith.constant 0.000000e+00 : f32
    %39 = vector.broadcast %cst_25 : f32 to vector<16x32xf32>
    %40 = arith.maximumf %38, %39 : vector<16x32xf32>
    %c0_26 = arith.constant 0 : index
    %c0_27 = arith.constant 0 : index
    %41 = vector.load %arg4[%c0_26, %c0_27] : memref<32x96xf32, #tpu.memory_space<vmem>>, vector<32x96xf32>
    %cst_28 = arith.constant dense<0.000000e+00> : vector<16x96xf32>
    %42 = tpu.matmul %40, %41, %cst_28 {dimension_numbers = #tpu.dot_dimension_numbers<[1], [0], [0], [1], [0, 0, 1, 1], [], []>} : vector<16x32xf32>, vector<32x96xf32>, vector<16x96xf32> -> vector<16x96xf32>
    %c0_29 = arith.constant 0 : index
    %c0_30 = arith.constant 0 : index
    %43 = vector.load %arg5[%c0_29, %c0_30] : memref<1x96xf32, #tpu.memory_space<vmem>>, vector<1x96xf32>
    %44 = vector.broadcast %43 : vector<1x96xf32> to vector<16x96xf32>
    %45 = arith.addf %42, %44 : vector<16x96xf32>
    %46 = vector.extract_strided_slice %45 {offsets = [0, 0], sizes = [16, 24], strides = [1, 1]} : vector<16x96xf32> to vector<16x24xf32>
    %c0_31 = arith.constant 0 : index
    %c0_32 = arith.constant 0 : index
    %c0_33 = arith.constant 0 : index
    %47 = vector.load %arg11[%c0_31, %c0_32, %c0_33] : memref<4x16x24xf32, #tpu.memory_space<vmem>>, vector<1x16x24xf32>
    %48 = vector.shape_cast %47 : vector<1x16x24xf32> to vector<16x24xf32>
    %49 = vector.shape_cast %46 : vector<16x24xf32> to vector<1x16x24xf32>
    tpu.vector_store %arg11[%c0_31, %c0_32, %c0_33], %49 {strides = array<i32>} : memref<4x16x24xf32, #tpu.memory_space<vmem>>, vector<1x16x24xf32>,
    %50 = vector.extract_strided_slice %45 {offsets = [0, 24], sizes = [16, 24], strides = [1, 1]} : vector<16x96xf32> to vector<16x24xf32>
    %c1_34 = arith.constant 1 : index
    %c0_35 = arith.constant 0 : index
    %c0_36 = arith.constant 0 : index
    %51 = vector.load %arg11[%c1_34, %c0_35, %c0_36] : memref<4x16x24xf32, #tpu.memory_space<vmem>>, vector<1x16x24xf32>
    %52 = vector.shape_cast %51 : vector<1x16x24xf32> to vector<16x24xf32>
    %53 = vector.shape_cast %50 : vector<16x24xf32> to vector<1x16x24xf32>
    tpu.vector_store %arg11[%c1_34, %c0_35, %c0_36], %53 {strides = array<i32>} : memref<4x16x24xf32, #tpu.memory_space<vmem>>, vector<1x16x24xf32>,
    %54 = vector.extract_strided_slice %45 {offsets = [0, 48], sizes = [16, 24], strides = [1, 1]} : vector<16x96xf32> to vector<16x24xf32>
    %c2_37 = arith.constant 2 : index
    %c0_38 = arith.constant 0 : index
    %c0_39 = arith.constant 0 : index
    %55 = vector.load %arg11[%c2_37, %c0_38, %c0_39] : memref<4x16x24xf32, #tpu.memory_space<vmem>>, vector<1x16x24xf32>
    %56 = vector.shape_cast %55 : vector<1x16x24xf32> to vector<16x24xf32>
    %57 = vector.shape_cast %54 : vector<16x24xf32> to vector<1x16x24xf32>
    tpu.vector_store %arg11[%c2_37, %c0_38, %c0_39], %57 {strides = array<i32>} : memref<4x16x24xf32, #tpu.memory_space<vmem>>, vector<1x16x24xf32>,
    %58 = vector.extract_strided_slice %45 {offsets = [0, 72], sizes = [16, 24], strides = [1, 1]} : vector<16x96xf32> to vector<16x24xf32>
    %c3_40 = arith.constant 3 : index
    %c0_41 = arith.constant 0 : index
    %c0_42 = arith.constant 0 : index
    %59 = vector.load %arg11[%c3_40, %c0_41, %c0_42] : memref<4x16x24xf32, #tpu.memory_space<vmem>>, vector<1x16x24xf32>
    %60 = vector.shape_cast %59 : vector<1x16x24xf32> to vector<16x24xf32>
    %61 = vector.shape_cast %58 : vector<16x24xf32> to vector<1x16x24xf32>
    tpu.vector_store %arg11[%c3_40, %c0_41, %c0_42], %61 {strides = array<i32>} : memref<4x16x24xf32, #tpu.memory_space<vmem>>, vector<1x16x24xf32>,
    %c0_43 = arith.constant 0 : index
    %c0_44 = arith.constant 0 : index
    %c0_45 = arith.constant 0 : index
    %62 = vector.load %arg11[%c0_43, %c0_44, %c0_45] : memref<4x16x24xf32, #tpu.memory_space<vmem>>, vector<4x16x8xf32>
    %c0_46 = arith.constant 0 : index
    %c0_47 = arith.constant 0 : index
    %c8 = arith.constant 8 : index
    %63 = vector.load %arg11[%c0_46, %c0_47, %c8] : memref<4x16x24xf32, #tpu.memory_space<vmem>>, vector<4x16x8xf32>
    %c0_48 = arith.constant 0 : index
    %c0_49 = arith.constant 0 : index
    %c16 = arith.constant 16 : index
    %64 = vector.load %arg11[%c0_48, %c0_49, %c16] : memref<4x16x24xf32, #tpu.memory_space<vmem>>, vector<4x16x8xf32>
    %cst_50 = arith.constant dense<0.000000e+00> : vector<4x16x16xf32>
    %65 = tpu.matmul %62, %63, %cst_50 {dimension_numbers = #tpu.dot_dimension_numbers<[2], [2], [1], [1], [0, 0, 0, 1, 1, 1], [0], [0]>} : vector<4x16x8xf32>, vector<4x16x8xf32>, vector<4x16x16xf32> -> vector<4x16x16xf32>
    %cst_51 = arith.constant dense<0x7F800000> : vector<4x16xf32>
    %66 = vector.multi_reduction <minimumf>, %65, %cst_51 [2] : vector<4x16x16xf32> to vector<4x16xf32>
    %67 = vector.shape_cast %66 : vector<4x16xf32> to vector<4x16x1xf32>
    %68 = vector.broadcast %67 : vector<4x16x1xf32> to vector<4x16x16xf32>
    %69 = arith.cmpf ole, %65, %68 : vector<4x16x16xf32>
    %cst_52 = arith.constant 0x7F800000 : f32
    %70 = vector.broadcast %cst_52 : f32 to vector<4x16x16xf32>
    %71 = arith.select %69, %70, %65 : vector<4x16x16xi1>, vector<4x16x16xf32>
    %cst_53 = arith.constant dense<0x7F800000> : vector<4x16xf32>
    %72 = vector.multi_reduction <minimumf>, %71, %cst_53 [2] : vector<4x16x16xf32> to vector<4x16xf32>
    %73 = vector.shape_cast %72 : vector<4x16xf32> to vector<4x16x1xf32>
    %74 = vector.broadcast %73 : vector<4x16x1xf32> to vector<4x16x16xf32>
    %75 = arith.cmpf ole, %71, %74 : vector<4x16x16xf32>
    %cst_54 = arith.constant 0x7F800000 : f32
    %76 = vector.broadcast %cst_54 : f32 to vector<4x16x16xf32>
    %77 = arith.select %75, %76, %71 : vector<4x16x16xi1>, vector<4x16x16xf32>
    %cst_55 = arith.constant dense<0x7F800000> : vector<4x16xf32>
    %78 = vector.multi_reduction <minimumf>, %77, %cst_55 [2] : vector<4x16x16xf32> to vector<4x16xf32>
    %79 = vector.shape_cast %78 : vector<4x16xf32> to vector<4x16x1xf32>
    %80 = vector.broadcast %79 : vector<4x16x1xf32> to vector<4x16x16xf32>
    %81 = arith.cmpf ole, %77, %80 : vector<4x16x16xf32>
    %cst_56 = arith.constant 0x7F800000 : f32
    %82 = vector.broadcast %cst_56 : f32 to vector<4x16x16xf32>
    %83 = arith.select %81, %82, %77 : vector<4x16x16xi1>, vector<4x16x16xf32>
    %cst_57 = arith.constant dense<0x7F800000> : vector<4x16xf32>
    %84 = vector.multi_reduction <minimumf>, %83, %cst_57 [2] : vector<4x16x16xf32> to vector<4x16xf32>
    %85 = vector.shape_cast %84 : vector<4x16xf32> to vector<4x16x1xf32>
    %86 = vector.broadcast %85 : vector<4x16x1xf32> to vector<4x16x16xf32>
    %87 = arith.cmpf ole, %83, %86 : vector<4x16x16xf32>
    %cst_58 = arith.constant 0x7F800000 : f32
    %88 = vector.broadcast %cst_58 : f32 to vector<4x16x16xf32>
    %89 = arith.select %87, %88, %83 : vector<4x16x16xi1>, vector<4x16x16xf32>
    %cst_59 = arith.constant dense<0x7F800000> : vector<4x16xf32>
    %90 = vector.multi_reduction <minimumf>, %89, %cst_59 [2] : vector<4x16x16xf32> to vector<4x16xf32>
    %91 = vector.shape_cast %90 : vector<4x16xf32> to vector<4x16x1xf32>
    %92 = vector.broadcast %91 : vector<4x16x1xf32> to vector<4x16x16xf32>
    %93 = arith.cmpf ole, %89, %92 : vector<4x16x16xf32>
    %cst_60 = arith.constant 0x7F800000 : f32
    %94 = vector.broadcast %cst_60 : f32 to vector<4x16x16xf32>
    %95 = arith.select %93, %94, %89 : vector<4x16x16xi1>, vector<4x16x16xf32>
    %cst_61 = arith.constant dense<0x7F800000> : vector<4x16xf32>
    %96 = vector.multi_reduction <minimumf>, %95, %cst_61 [2] : vector<4x16x16xf32> to vector<4x16xf32>
    %97 = vector.shape_cast %96 : vector<4x16xf32> to vector<4x16x1xf32>
    %98 = vector.broadcast %97 : vector<4x16x1xf32> to vector<4x16x16xf32>
    %99 = arith.cmpf ole, %95, %98 : vector<4x16x16xf32>
    %cst_62 = arith.constant 0x7F800000 : f32
    %100 = vector.broadcast %cst_62 : f32 to vector<4x16x16xf32>
    %101 = arith.select %99, %100, %95 : vector<4x16x16xi1>, vector<4x16x16xf32>
    %cst_63 = arith.constant dense<0x7F800000> : vector<4x16xf32>
    %102 = vector.multi_reduction <minimumf>, %101, %cst_63 [2] : vector<4x16x16xf32> to vector<4x16xf32>
    %103 = vector.shape_cast %102 : vector<4x16xf32> to vector<4x16x1xf32>
    %104 = vector.broadcast %103 : vector<4x16x1xf32> to vector<4x16x16xf32>
    %105 = arith.cmpf oge, %65, %104 : vector<4x16x16xf32>
    %cst_64 = arith.constant 0xFF800000 : f32
    %106 = vector.broadcast %cst_64 : f32 to vector<4x16x16xf32>
    %107 = arith.select %105, %65, %106 : vector<4x16x16xi1>, vector<4x16x16xf32>
    %cst_65 = arith.constant dense<0xFF800000> : vector<4x16xf32>
    %108 = vector.multi_reduction <maximumf>, %107, %cst_65 [2] : vector<4x16x16xf32> to vector<4x16xf32>
    %109 = vector.shape_cast %108 : vector<4x16xf32> to vector<4x16x1xf32>
    %110 = vector.broadcast %109 : vector<4x16x1xf32> to vector<4x16x16xf32>
    %111 = arith.subf %107, %110 : vector<4x16x16xf32>
    %112 = math.exp %111 : vector<4x16x16xf32>
    %cst_66 = arith.constant dense<0.000000e+00> : vector<4x16xf32>
    %113 = vector.multi_reduction <add>, %112, %cst_66 [2] : vector<4x16x16xf32> to vector<4x16xf32>
    %114 = vector.shape_cast %113 : vector<4x16xf32> to vector<4x16x1xf32>
    %115 = tpu.reciprocal %114 {approx = true} : vector<4x16x1xf32> -> vector<4x16x1xf32>
    %cst_67 = arith.constant 5.000000e-01 : f32
    %116 = vector.broadcast %cst_67 : f32 to vector<4x16x1xf32>
    %117 = arith.mulf %116, %115 : vector<4x16x1xf32>
    %118 = tpu.iota {dimensions = array<i32: 0>} : vector<16x16xi32>
    %119 = tpu.iota {dimensions = array<i32: 1>} : vector<16x16xi32>
    %120 = arith.subi %118, %119 : vector<16x16xi32>
    %121 = math.absi %120 : vector<16x16xi32>
    %c2_i32 = arith.constant 2 : i32
    %122 = vector.broadcast %c2_i32 : i32 to vector<16x16xi32>
    %123 = arith.cmpi sle, %121, %122 : vector<16x16xi32>
    %cst_68 = arith.constant 5.000000e-01 : f32
    %cst_69 = arith.constant 0.000000e+00 : f32
    %124 = vector.broadcast %cst_68 : f32 to vector<16x16xf32>
    %125 = vector.broadcast %cst_69 : f32 to vector<16x16xf32>
    %126 = arith.select %123, %124, %125 : vector<16x16xi1>, vector<16x16xf32>
    %127 = vector.broadcast %117 : vector<4x16x1xf32> to vector<4x16x16xf32>
    %128 = arith.mulf %112, %127 : vector<4x16x16xf32>
    %129 = vector.shape_cast %126 : vector<16x16xf32> to vector<1x16x16xf32>
    %130 = vector.broadcast %129 : vector<1x16x16xf32> to vector<4x16x16xf32>
    %131 = arith.addf %128, %130 : vector<4x16x16xf32>
    %132 = arith.truncf %131 : vector<4x16x16xf32> to vector<4x16x16xbf16>
    %133 = arith.truncf %64 : vector<4x16x8xf32> to vector<4x16x8xbf16>
    %cst_70 = arith.constant dense<0.000000e+00> : vector<4x16x8xf32>
    %134 = tpu.matmul %132, %133, %cst_70 {dimension_numbers = #tpu.dot_dimension_numbers<[2], [1], [1], [2], [0, 0, 0, 1, 1, 2], [0], [0]>} : vector<4x16x16xbf16>, vector<4x16x8xbf16>, vector<4x16x8xf32> -> vector<4x16x8xf32>
    %135 = arith.truncf %134 : vector<4x16x8xf32> to vector<4x16x8xbf16>
    %c0_71 = arith.constant 0 : index
    %c0_72 = arith.constant 0 : index
    %c0_73 = arith.constant 0 : index
    %136 = vector.load %arg6[%c0_71, %c0_72, %c0_73] : memref<4x8x32xbf16, #tpu.memory_space<vmem>>, vector<4x8x32xbf16>
    %cst_74 = arith.constant dense<0.000000e+00> : vector<4x16x32xf32>
    %137 = tpu.matmul %135, %136, %cst_74 {dimension_numbers = #tpu.dot_dimension_numbers<[2], [1], [1], [2], [0, 0, 0, 1, 1, 2], [0], [0]>} : vector<4x16x8xbf16>, vector<4x8x32xbf16>, vector<4x16x32xf32> -> vector<4x16x32xf32>
    %cst_75 = arith.constant dense<0.000000e+00> : vector<16x32xf32>
    %138 = vector.multi_reduction <add>, %137, %cst_75 [0] : vector<4x16x32xf32> to vector<16x32xf32>
    %c0_76 = arith.constant 0 : index
    %c0_77 = arith.constant 0 : index
    %139 = vector.load %arg7[%c0_76, %c0_77] : memref<1x32xf32, #tpu.memory_space<vmem>>, vector<1x32xf32>
    %140 = vector.broadcast %139 : vector<1x32xf32> to vector<16x32xf32>
    %141 = arith.addf %138, %140 : vector<16x32xf32>
    %142 = arith.addf %141, %40 : vector<16x32xf32>
    %cst_78 = arith.constant dense<0.000000e+00> : vector<16xf32>
    %143 = vector.multi_reduction <add>, %142, %cst_78 [1] : vector<16x32xf32> to vector<16xf32>
    %144 = vector.shape_cast %143 : vector<16xf32> to vector<16x1xf32>
    %cst_79 = arith.constant 3.200000e+01 : f32
    %145 = vector.broadcast %cst_79 : f32 to vector<16x1xf32>
    %146 = arith.divf %144, %145 : vector<16x1xf32>
    %147 = vector.broadcast %146 : vector<16x1xf32> to vector<16x32xf32>
    %148 = arith.subf %142, %147 : vector<16x32xf32>
    %149 = arith.mulf %148, %148 : vector<16x32xf32>
    %cst_80 = arith.constant dense<0.000000e+00> : vector<16xf32>
    %150 = vector.multi_reduction <add>, %149, %cst_80 [1] : vector<16x32xf32> to vector<16xf32>
    %151 = vector.shape_cast %150 : vector<16xf32> to vector<16x1xf32>
    %cst_81 = arith.constant 3.200000e+01 : f32
    %152 = vector.broadcast %cst_81 : f32 to vector<16x1xf32>
    %153 = arith.divf %151, %152 : vector<16x1xf32>
    %cst_82 = arith.constant 9.99999974E-6 : f32
    %154 = vector.broadcast %cst_82 : f32 to vector<16x1xf32>
    %155 = arith.addf %153, %154 : vector<16x1xf32>
    %156 = math.rsqrt %155 : vector<16x1xf32>
    %157 = vector.broadcast %156 : vector<16x1xf32> to vector<16x32xf32>
    %158 = arith.mulf %148, %157 : vector<16x32xf32>
    %c0_83 = arith.constant 0 : index
    %c0_84 = arith.constant 0 : index
    %159 = vector.load %arg8[%c0_83, %c0_84] : memref<1x32xf32, #tpu.memory_space<vmem>>, vector<1x32xf32>
    %160 = vector.broadcast %159 : vector<1x32xf32> to vector<16x32xf32>
    %161 = arith.mulf %158, %160 : vector<16x32xf32>
    %c0_85 = arith.constant 0 : index
    %c0_86 = arith.constant 0 : index
    %162 = vector.load %arg9[%c0_85, %c0_86] : memref<1x32xf32, #tpu.memory_space<vmem>>, vector<1x32xf32>
    %163 = vector.broadcast %162 : vector<1x32xf32> to vector<16x32xf32>
    %164 = arith.addf %161, %163 : vector<16x32xf32>
    %c0_87 = arith.constant 0 : index
    %c0_88 = arith.constant 0 : index
    %c0_89 = arith.constant 0 : index
    %165 = vector.load %arg10[%c0_87, %c0_88, %c0_89] : memref<1x16x32xf32, #tpu.memory_space<vmem>>, vector<1x16x32xf32>
    %166 = vector.shape_cast %165 : vector<1x16x32xf32> to vector<16x32xf32>
    %167 = vector.shape_cast %164 : vector<16x32xf32> to vector<1x16x32xf32>
    tpu.vector_store %arg10[%c0_87, %c0_88, %c0_89], %167 {strides = array<i32>} : memref<1x16x32xf32, #tpu.memory_space<vmem>>, vector<1x16x32xf32>,
    return
  }
  func.func @transform_0(%arg0: i32) -> (i32, i32, i32) {
    %c0_i32 = arith.constant 0 : i32
    %c0_i32_0 = arith.constant 0 : i32
    %c0_i32_1 = arith.constant 0 : i32
    return %arg0, %c0_i32, %c0_i32_0 : i32, i32, i32
  }
  func.func @transform_1(%arg0: i32) -> (i32, i32, i32) {
    %c0_i32 = arith.constant 0 : i32
    %c0_i32_0 = arith.constant 0 : i32
    %c0_i32_1 = arith.constant 0 : i32
    %c0_i32_2 = arith.constant 0 : i32
    return %c0_i32, %c0_i32_0, %c0_i32_1 : i32, i32, i32
  }
  func.func @transform_2(%arg0: i32) -> (i32, i32) {
    %c0_i32 = arith.constant 0 : i32
    %c0_i32_0 = arith.constant 0 : i32
    %c0_i32_1 = arith.constant 0 : i32
    return %c0_i32, %c0_i32_0 : i32, i32
  }
  func.func @transform_3(%arg0: i32) -> (i32, i32) {
    %c0_i32 = arith.constant 0 : i32
    %c0_i32_0 = arith.constant 0 : i32
    %c0_i32_1 = arith.constant 0 : i32
    return %c0_i32, %c0_i32_0 : i32, i32
  }
  func.func @transform_4(%arg0: i32) -> (i32, i32) {
    %c0_i32 = arith.constant 0 : i32
    %c0_i32_0 = arith.constant 0 : i32
    %c0_i32_1 = arith.constant 0 : i32
    return %c0_i32, %c0_i32_0 : i32, i32
  }
  func.func @transform_5(%arg0: i32) -> (i32, i32, i32) {
    %c0_i32 = arith.constant 0 : i32
    %c0_i32_0 = arith.constant 0 : i32
    %c0_i32_1 = arith.constant 0 : i32
    %c0_i32_2 = arith.constant 0 : i32
    return %c0_i32, %c0_i32_0, %c0_i32_1 : i32, i32, i32
  }
  func.func @transform_6(%arg0: i32) -> (i32, i32) {
    %c0_i32 = arith.constant 0 : i32
    %c0_i32_0 = arith.constant 0 : i32
    %c0_i32_1 = arith.constant 0 : i32
    return %c0_i32, %c0_i32_0 : i32, i32
  }
  func.func @transform_7(%arg0: i32) -> (i32, i32) {
    %c0_i32 = arith.constant 0 : i32
    %c0_i32_0 = arith.constant 0 : i32
    %c0_i32_1 = arith.constant 0 : i32
    return %c0_i32, %c0_i32_0 : i32, i32
  }
  func.func @transform_8(%arg0: i32) -> (i32, i32) {
    %c0_i32 = arith.constant 0 : i32
    %c0_i32_0 = arith.constant 0 : i32
    %c0_i32_1 = arith.constant 0 : i32
    return %c0_i32, %c0_i32_0 : i32, i32
  }
  func.func @transform_9(%arg0: i32) -> (i32, i32, i32) {
    %c0_i32 = arith.constant 0 : i32
    %c0_i32_0 = arith.constant 0 : i32
    %c0_i32_1 = arith.constant 0 : i32
    return %arg0, %c0_i32, %c0_i32_0 : i32, i32, i32
  }
}

</mosaic_0001>

<llo_original>
// kernel: tpu_custom_call.1
$region0: #{tpu_custom_call.1}
  #allocation0 [shape = 'u32[]', space=smem, size = 0x4, offset = 0x4, fixed_abs, tag = 'smem constant byte address 0x4 - core index']
  #allocation1 [shape = 'u32[144,128]{1,0:T(1,128)}', space=vmem, size = 0x12000, scoped, tag = 'internal scratch']
  #allocation2 [shape = 'f32[4,16,24]{2,1,0:T(8,128)}', space=vmem, size = 0x8000, scoped, tag = 'scratch operand']
  %s0 = inlined_call_operand.vmem [shape: f32[2,22,24], index: 0, kind: input, shape index: {}]
  %s1 = inlined_call_operand.hbm [shape: f32[7,24,32], index: 1, kind: input, shape index: {}]
  %s2 = inlined_call_operand.vmem [shape: f32[1,32], index: 2, kind: input, shape index: {}]
  %s3 = inlined_call_operand.vmem [shape: f32[32,96], index: 3, kind: input, shape index: {}]
  %s4 = inlined_call_operand.vmem [shape: f32[1,96], index: 4, kind: input, shape index: {}]
  %s5 = inlined_call_operand.vmem [shape: bf16[4,8,32], index: 5, kind: input, shape index: {}]
  %s6 = inlined_call_operand.vmem [shape: f32[1,32], index: 6, kind: input, shape index: {}]
  %s7 = inlined_call_operand.vmem [shape: f32[1,32], index: 7, kind: input, shape index: {}]
  %s8 = inlined_call_operand.vmem [shape: f32[1,32], index: 8, kind: input, shape index: {}]
  %s9 = inlined_call_operand.hbm [shape: f32[2,16,32], index: 9, kind: output, shape index: {}]
  %s10 = sld [smem:[#allocation0]]
  $region73: #{tpu_custom_call.1} parent=0
    _
  %s12 = ssub.s32 1, %s10
  %s13 = scalar_select 0, %s12, %s10
  $region1: #{tpu_custom_call.1} parent=0
    #allocation3 [shape = 'u8[86016]{0}', space=vmem, size = 0x15000, scoped, tag = 'input window, operand 1, single buffered']
    #allocation4 [shape = 's32[2]{0}', space=sflag, size = 0x8, scoped, tag = 'scoped memory for tpu_custom_call.1']
    #allocation5 [shape = 's32[2]{0}', space=sflag, size = 0x8, scoped, tag = 'scoped memory for tpu_custom_call.1']
    #allocation6 [shape = 'u8[16384]{0}', space=vmem, size = 0x4000, scoped, tag = 'output window, operand 0']
    %14 = vsyncpa [#allocation4], 0
    %15 = vsyncpa [#allocation5], 0
    %s16 = scalar_lea.sflag [#allocation5], 1
    %17 = vsyncpa %s16, 0
    loop: start=0, step=1, limit=4
    $region2: #{tpu_custom_call.1} parent=1 // loop_pre_header
      _
    $region3: #{tpu_custom_call.1} parent=1 // loop_header
      %s19 = sphi 0, %s23
      %p20 = scmp.ge.s32.totalorder %s19, 4
      %s29 = sphi 0, %s31
      %s32 = sphi 0, %s29
      %s33 = sphi 0, %s32
      %s49 = sphi 0, %s33
      %s53 = sphi 0, %s53
      %s55 = sphi 0, %s53
      %s56 = sphi 0, %s55
      %s70 = sphi 0, %s56
      %s74 = sphi 0, %s74
      %s76 = sphi 0, %s74
      %s77 = sphi 0, %s76
      %s91 = sphi 0, %s77
      %s95 = sphi 0, %s95
      %s97 = sphi 0, %s95
      %s98 = sphi 0, %s97
      %s112 = sphi 0, %s98
      %s116 = sphi 0, %s116
      %s118 = sphi 0, %s116
      %s119 = sphi 0, %s118
      %s133 = sphi 0, %s119
      %s137 = sphi 0, %s137
      %s139 = sphi 0, %s137
      %s140 = sphi 0, %s139
      %s154 = sphi 0, %s140
      %s158 = sphi 0, %s158
      %s160 = sphi 0, %s158
      %s161 = sphi 0, %s160
      %s175 = sphi 0, %s161
      %s179 = sphi 0, %s179
      %s181 = sphi 0, %s179
      %s182 = sphi 0, %s181
      %s196 = sphi 0, %s182
      %s200 = sphi 0, %s200
      %s202 = sphi 0, %s200
      %s203 = sphi 0, %s202
      %s217 = sphi 0, %s203
      %s223 = sphi 0, %s225
      %s226 = sphi 0, %s223
      %s227 = sphi 0, %s226
      %s243 = sphi 0, %s227
    $region4: #{tpu_custom_call.1} parent=1 // loop_header_branch
      %22 = sbr.rel (%p20) target = $region8
    $region5: #{tpu_custom_call.1} parent=1 // loop_body
      %s24 = ssub.s32 %s19, 1
      %s25 = ssub.s32 %s19, 2
      %s26 = sadd.s32 %s19, 1
      %s27 = ssub.s32 %s19, %s26
      %p28 = scmp.eq.s32.totalorder %s27, 0
      %s30 = sadd.s32 %s29, 1
      %s31 = scalar_select %p28, %s29, %s30
      %p34 = pneg %p28
      %p35 = scmp.eq.s32.totalorder %s19, 1
      %p36 = por %p34, %p35
      %p37 = scmp.ne.s32.totalorder %s29, %s32
      %p38 = scmp.eq.s32.totalorder %s19, 0
      %p39 = por %p37, %p38
      %p40 = scmp.ne.s32.totalorder %s29, %s32
      %p41 = scmp.eq.s32.totalorder %s24, 1
      %p42 = por %p40, %p41
      %p43 = scmp.ne.s32.totalorder %s32, %s33
      %p44 = scmp.eq.s32.totalorder %s24, 0
      %p45 = por %p43, %p44
      %p46 = scmp.ne.s32.totalorder %s32, %s33
      %p47 = scmp.eq.s32.totalorder %s25, 1
      %p48 = por %p46, %p47
      %p50 = scmp.ne.s32.totalorder %s33, %s49
      %p51 = scmp.eq.s32.totalorder %s25, 0
      %p52 = por %p50, %p51
      %s54 = sadd.s32 %s53, 1
      %p57 = scmp.eq.s32.totalorder %s19, 1
      %p58 = scmp.ne.s32.totalorder %s53, %s55
      %p59 = scmp.eq.s32.totalorder %s19, 0
      %p60 = por %p58, %p59
      %p61 = scmp.ne.s32.totalorder %s53, %s55
      %p62 = scmp.eq.s32.totalorder %s24, 1
      %p63 = por %p61, %p62
      %p64 = scmp.ne.s32.totalorder %s55, %s56
      %p65 = scmp.eq.s32.totalorder %s24, 0
      %p66 = por %p64, %p65
      %p67 = scmp.ne.s32.totalorder %s55, %s56
      %p68 = scmp.eq.s32.totalorder %s25, 1
      %p69 = por %p67, %p68
      %p71 = scmp.ne.s32.totalorder %s56, %s70
      %p72 = scmp.eq.s32.totalorder %s25, 0
      %p73 = por %p71, %p72
      %s75 = sadd.s32 %s74, 1
      %p78 = scmp.eq.s32.totalorder %s19, 1
      %p79 = scmp.ne.s32.totalorder %s74, %s76
      %p80 = scmp.eq.s32.totalorder %s19, 0
      %p81 = por %p79, %p80
      %p82 = scmp.ne.s32.totalorder %s74, %s76
      %p83 = scmp.eq.s32.totalorder %s24, 1
      %p84 = por %p82, %p83
      %p85 = scmp.ne.s32.totalorder %s76, %s77
      %p86 = scmp.eq.s32.totalorder %s24, 0
      %p87 = por %p85, %p86
      %p88 = scmp.ne.s32.totalorder %s76, %s77
      %p89 = scmp.eq.s32.totalorder %s25, 1
      %p90 = por %p88, %p89
      %p92 = scmp.ne.s32.totalorder %s77, %s91
      %p93 = scmp.eq.s32.totalorder %s25, 0
      %p94 = por %p92, %p93
      %s96 = sadd.s32 %s95, 1
      %p99 = scmp.eq.s32.totalorder %s19, 1
      %p100 = scmp.ne.s32.totalorder %s95, %s97
      %p101 = scmp.eq.s32.totalorder %s19, 0
      %p102 = por %p100, %p101
      %p103 = scmp.ne.s32.totalorder %s95, %s97
      %p104 = scmp.eq.s32.totalorder %s24, 1
      %p105 = por %p103, %p104
      %p106 = scmp.ne.s32.totalorder %s97, %s98
      %p107 = scmp.eq.s32.totalorder %s24, 0
      %p108 = por %p106, %p107
      %p109 = scmp.ne.s32.totalorder %s97, %s98
      %p110 = scmp.eq.s32.totalorder %s25, 1
      %p111 = por %p109, %p110
      %p113 = scmp.ne.s32.totalorder %s98, %s112
      %p114 = scmp.eq.s32.totalorder %s25, 0
      %p115 = por %p113, %p114
      %s117 = sadd.s32 %s116, 1
      %p120 = scmp.eq.s32.totalorder %s19, 1
      %p121 = scmp.ne.s32.totalorder %s116, %s118
      %p122 = scmp.eq.s32.totalorder %s19, 0
      %p123 = por %p121, %p122
      %p124 = scmp.ne.s32.totalorder %s116, %s118
      %p125 = scmp.eq.s32.totalorder %s24, 1
      %p126 = por %p124, %p125
      %p127 = scmp.ne.s32.totalorder %s118, %s119
      %p128 = scmp.eq.s32.totalorder %s24, 0
      %p129 = por %p127, %p128
      %p130 = scmp.ne.s32.totalorder %s118, %s119
      %p131 = scmp.eq.s32.totalorder %s25, 1
      %p132 = por %p130, %p131
      %p134 = scmp.ne.s32.totalorder %s119, %s133
      %p135 = scmp.eq.s32.totalorder %s25, 0
      %p136 = por %p134, %p135
      %s138 = sadd.s32 %s137, 1
      %p141 = scmp.eq.s32.totalorder %s19, 1
      %p142 = scmp.ne.s32.totalorder %s137, %s139
      %p143 = scmp.eq.s32.totalorder %s19, 0
      %p144 = por %p142, %p143
      %p145 = scmp.ne.s32.totalorder %s137, %s139
      %p146 = scmp.eq.s32.totalorder %s24, 1
      %p147 = por %p145, %p146
      %p148 = scmp.ne.s32.totalorder %s139, %s140
      %p149 = scmp.eq.s32.totalorder %s24, 0
      %p150 = por %p148, %p149
      %p151 = scmp.ne.s32.totalorder %s139, %s140
      %p152 = scmp.eq.s32.totalorder %s25, 1
      %p153 = por %p151, %p152
      %p155 = scmp.ne.s32.totalorder %s140, %s154
      %p156 = scmp.eq.s32.totalorder %s25, 0
      %p157 = por %p155, %p156
      %s159 = sadd.s32 %s158, 1
      %p162 = scmp.eq.s32.totalorder %s19, 1
      %p163 = scmp.ne.s32.totalorder %s158, %s160
      %p164 = scmp.eq.s32.totalorder %s19, 0
      %p165 = por %p163, %p164
      %p166 = scmp.ne.s32.totalorder %s158, %s160
      %p167 = scmp.eq.s32.totalorder %s24, 1
      %p168 = por %p166, %p167
      %p169 = scmp.ne.s32.totalorder %s160, %s161
      %p170 = scmp.eq.s32.totalorder %s24, 0
      %p171 = por %p169, %p170
      %p172 = scmp.ne.s32.totalorder %s160, %s161
      %p173 = scmp.eq.s32.totalorder %s25, 1
      %p174 = por %p172, %p173
      %p176 = scmp.ne.s32.totalorder %s161, %s175
      %p177 = scmp.eq.s32.totalorder %s25, 0
      %p178 = por %p176, %p177
      %s180 = sadd.s32 %s179, 1
      %p183 = scmp.eq.s32.totalorder %s19, 1
      %p184 = scmp.ne.s32.totalorder %s179, %s181
      %p185 = scmp.eq.s32.totalorder %s19, 0
      %p186 = por %p184, %p185
      %p187 = scmp.ne.s32.totalorder %s179, %s181
      %p188 = scmp.eq.s32.totalorder %s24, 1
      %p189 = por %p187, %p188
      %p190 = scmp.ne.s32.totalorder %s181, %s182
      %p191 = scmp.eq.s32.totalorder %s24, 0
      %p192 = por %p190, %p191
      %p193 = scmp.ne.s32.totalorder %s181, %s182
      %p194 = scmp.eq.s32.totalorder %s25, 1
      %p195 = por %p193, %p194
      %p197 = scmp.ne.s32.totalorder %s182, %s196
      %p198 = scmp.eq.s32.totalorder %s25, 0
      %p199 = por %p197, %p198
      %s201 = sadd.s32 %s200, 1
      %p204 = scmp.eq.s32.totalorder %s19, 1
      %p205 = scmp.ne.s32.totalorder %s200, %s202
      %p206 = scmp.eq.s32.totalorder %s19, 0
      %p207 = por %p205, %p206
      %p208 = scmp.ne.s32.totalorder %s200, %s202
      %p209 = scmp.eq.s32.totalorder %s24, 1
      %p210 = por %p208, %p209
      %p211 = scmp.ne.s32.totalorder %s202, %s203
      %p212 = scmp.eq.s32.totalorder %s24, 0
      %p213 = por %p211, %p212
      %p214 = scmp.ne.s32.totalorder %s202, %s203
      %p215 = scmp.eq.s32.totalorder %s25, 1
      %p216 = por %p214, %p215
      %p218 = scmp.ne.s32.totalorder %s203, %s217
      %p219 = scmp.eq.s32.totalorder %s25, 0
      %p220 = por %p218, %p219
      %s221 = ssub.s32 %s19, %s26
      %p222 = scmp.eq.s32.totalorder %s221, 0
      %s224 = sadd.s32 %s223, 1
      %s225 = scalar_select %p222, %s223, %s224
      %p228 = pneg %p222
      %p229 = scmp.eq.s32.totalorder %s19, 1
      %p230 = por %p228, %p229
      %p231 = scmp.ne.s32.totalorder %s223, %s226
      %p232 = scmp.eq.s32.totalorder %s19, 0
      %p233 = por %p231, %p232
      %p234 = scmp.ne.s32.totalorder %s223, %s226
      %p235 = scmp.eq.s32.totalorder %s24, 1
      %p236 = por %p234, %p235
      %p237 = scmp.ne.s32.totalorder %s226, %s227
      %p238 = scmp.eq.s32.totalorder %s24, 0
      %p239 = por %p237, %p238
      %p240 = scmp.ne.s32.totalorder %s226, %s227
      %p241 = scmp.eq.s32.totalorder %s25, 1
      %p242 = por %p240, %p241
      %p244 = scmp.ne.s32.totalorder %s227, %s243
      %p245 = scmp.eq.s32.totalorder %s25, 0
      %p246 = por %p244, %p245
      %p247 = scmp.le.s32.totalorder 1, %s19
      %p248 = scmp.lt.s32.totalorder %s19, 3
      %p249 = pnand %p247, %p248
      %p250 = pneg %p249
      // Predicated region
      $region9: #{tpu_custom_call.1} parent=5 // pred_check
        _
      $region10: #{tpu_custom_call.1} parent=5 // pred_check_branch
        %252 = sbr.rel (%p249) target = $region12
      $region11: #{tpu_custom_call.1} parent=5 // pred_region
        %s253 = ssub.s32 %s19, 1
        // Predicated region
        $region13: #{tpu_custom_call.1} parent=11 // pred_check
          %p254 = pneg %p66
        $region14: #{tpu_custom_call.1} parent=11 // pred_check_branch
          %256 = sbr.rel (%p254) target = $region16
        $region15: #{tpu_custom_call.1} parent=11 // pred_region
          %s258 = ssub.s32 2688, 2688
          %259 = vsyncadd [#allocation4], %s258
          %s260 = sshll.u32 [#allocation3], 4
          %s261 = int_to_ptr.vmem [resolvable:$true] %s260
          %266 = dma.hbm_to_vmem [thread:$0]  %s1, 2688, %s261, [#allocation4], 128, 128, 8
        $region16: #{tpu_custom_call.1} parent=11 // pred_fallthru
          _
        // Predicated region
        $region17: #{tpu_custom_call.1} parent=11 // pred_check
          %p267 = pneg %p87
        $region18: #{tpu_custom_call.1} parent=11 // pred_check_branch
          %269 = sbr.rel (%p267) target = $region20
        $region19: #{tpu_custom_call.1} parent=11 // pred_region
          _
        $region20: #{tpu_custom_call.1} parent=11 // pred_fallthru
          _
        // Predicated region
        $region21: #{tpu_custom_call.1} parent=11 // pred_check
          %p270 = pneg %p108
        $region22: #{tpu_custom_call.1} parent=11 // pred_check_branch
          %272 = sbr.rel (%p270) target = $region24
        $region23: #{tpu_custom_call.1} parent=11 // pred_region
          _
        $region24: #{tpu_custom_call.1} parent=11 // pred_fallthru
          _
        // Predicated region
        $region25: #{tpu_custom_call.1} parent=11 // pred_check
          %p273 = pneg %p129
        $region26: #{tpu_custom_call.1} parent=11 // pred_check_branch
          %275 = sbr.rel (%p273) target = $region28
        $region27: #{tpu_custom_call.1} parent=11 // pred_region
          _
        $region28: #{tpu_custom_call.1} parent=11 // pred_fallthru
          _
        // Predicated region
        $region29: #{tpu_custom_call.1} parent=11 // pred_check
          %p276 = pneg %p150
        $region30: #{tpu_custom_call.1} parent=11 // pred_check_branch
          %278 = sbr.rel (%p276) target = $region32
        $region31: #{tpu_custom_call.1} parent=11 // pred_region
          _
        $region32: #{tpu_custom_call.1} parent=11 // pred_fallthru
          _
        // Predicated region
        $region33: #{tpu_custom_call.1} parent=11 // pred_check
          %p279 = pneg %p171
        $region34: #{tpu_custom_call.1} parent=11 // pred_check_branch
          %281 = sbr.rel (%p279) target = $region36
        $region35: #{tpu_custom_call.1} parent=11 // pred_region
          _
        $region36: #{tpu_custom_call.1} parent=11 // pred_fallthru
          _
        // Predicated region
        $region37: #{tpu_custom_call.1} parent=11 // pred_check
          %p282 = pneg %p192
        $region38: #{tpu_custom_call.1} parent=11 // pred_check_branch
          %284 = sbr.rel (%p282) target = $region40
        $region39: #{tpu_custom_call.1} parent=11 // pred_region
          _
        $region40: #{tpu_custom_call.1} parent=11 // pred_fallthru
          _
        // Predicated region
        $region41: #{tpu_custom_call.1} parent=11 // pred_check
          %p285 = pneg %p213
        $region42: #{tpu_custom_call.1} parent=11 // pred_check_branch
          %287 = sbr.rel (%p285) target = $region44
        $region43: #{tpu_custom_call.1} parent=11 // pred_region
          _
        $region44: #{tpu_custom_call.1} parent=11 // pred_fallthru
          _
      $region12: #{tpu_custom_call.1} parent=5 // pred_fallthru
        _
      %p288 = scmp.lt.s32.totalorder %s19, 2
      // Predicated region
      $region45: #{tpu_custom_call.1} parent=5 // pred_check
        %p289 = pneg %p288
      $region46: #{tpu_custom_call.1} parent=5 // pred_check_branch
        %291 = sbr.rel (%p289) target = $region48
      $region47: #{tpu_custom_call.1} parent=5 // pred_region
        // Predicated region
        $region49: #{tpu_custom_call.1} parent=47 // pred_check
          %p292 = pneg %p39
        $region50: #{tpu_custom_call.1} parent=47 // pred_check_branch
          %294 = sbr.rel (%p292) target = $region52
        $region51: #{tpu_custom_call.1} parent=47 // pred_region
          %p295 = scmp.lt.s32.totalorder %s19, 1
          %s296 = scalar_select %p295, %s19, 1
          %s297 = smul.addr %s296, 3
          %s298 = smul.addr %s297, 8
          %s299 = scalar_lea.vmem %s0, %s298
        $region52: #{tpu_custom_call.1} parent=47 // pred_fallthru
          _
      $region48: #{tpu_custom_call.1} parent=5 // pred_fallthru
        _
      %p300 = scmp.le.s32.totalorder 1, %s19
      %p301 = scmp.lt.s32.totalorder %s19, 3
      %p302 = pnand %p300, %p301
      %p303 = pneg %p302
      // Predicated region
      $region53: #{tpu_custom_call.1} parent=5 // pred_check
        _
      $region54: #{tpu_custom_call.1} parent=5 // pred_check_branch
        %305 = sbr.rel (%p302) target = $region56
      $region55: #{tpu_custom_call.1} parent=5 // pred_region
        %s306 = ssub.s32 %s19, 1
        // Predicated region
        $region57: #{tpu_custom_call.1} parent=55 // pred_check
          %p307 = pneg %p66
        $region58: #{tpu_custom_call.1} parent=55 // pred_check_branch
          %309 = sbr.rel (%p307) target = $region60
        $region59: #{tpu_custom_call.1} parent=55 // pred_region
          %310 = dma.done [#allocation4], 2688
        $region60: #{tpu_custom_call.1} parent=55 // pred_fallthru
          _
        %p311 = scmp.lt.s32.totalorder %s24, 1
        %s312 = scalar_select %p311, %s24, 1
        %s313 = smul.addr %s312, 3
        %s314 = smul.addr %s313, 8
        %s315 = scalar_lea.vmem %s0, %s314
        %p316 = pneg %p45
        %p317 = pneg %p42
        %p318 = pneg %p66
        %p319 = pneg %p63
        %p320 = pneg %p87
        %p321 = pneg %p84
        %p322 = pneg %p108
        %p323 = pneg %p105
        %p324 = pneg %p129
        %p325 = pneg %p126
        %p326 = pneg %p150
        %p327 = pneg %p147
        %p328 = pneg %p171
        %p329 = pneg %p168
        %p330 = pneg %p192
        %p331 = pneg %p189
        %p332 = pneg %p213
        %p333 = pneg %p210
        %p334 = pneg %p239
        %p335 = pneg %p236
        %s336 = sand.u32 %s226, 1
        %s337 = scalar_lea.sflag [#allocation5], %s336
        %s338 = sand.u32 %s226, 1
        %s339 = smul.addr %s338, 16
        %s340 = scalar_lea.vmem [#allocation6], %s339
        %p341 = scmp.lt.s32.totalorder %s24, 1
        %s342 = scalar_select %p341, %s24, 1
        %s343 = smul.addr %s342, 3
        %s344 = smul.addr %s343, 8
        %s345 = scalar_lea.vmem %s0, %s344
        %v347 = vld [vmem:[%s345] sm:$0xff]
        %v348 = vld [vmem:[%s345 + $0x8] sm:$0xff]
        %v349 = vld [vmem:[%s345 + $0x10] sm:$0x3f]
        %v350 = vld [vmem:[#allocation3] sm:$0xff]
        %v351 = vld [vmem:[#allocation3 + $0x8] sm:$0xff]
        %v352 = vld [vmem:[#allocation3 + $0x10] sm:$0xff]
        %s353 = scalar_lea.vmem [#allocation3], 24
        %v354 = vld [vmem:[%s353] sm:$0xff]
        %v355 = vld [vmem:[%s353 + $0x8] sm:$0xff]
        %v356 = vld [vmem:[%s353 + $0x10] sm:$0xff]
        %vm360 = vcmask 1046528
        %v361 = vrot.slane %v347, 1
        %v362 = vrot.slane %v348, 1
        %v363 = vsel %vm360, %v361, %v362
        %v364 = vrot.slane %v349, 1
        %v365 = vsel %vm360, %v362, %v364
        %vm366 = vcmask 195584
        %v367 = vsel %vm366, %v363, 0
        %v369 = vsel %vm366, %v365, 0
        %371 = vmatprep.subr.mxu0 0.0
        %372 = vmatpush1.msra.mxu0 %v354
        %373 = vmatprep.subr.mxu0 0.0
        %374 = vmatpush1.msra.mxu0 %v355
        %375 = vmatprep.subr.mxu0 0.0
        %376 = vmatpush1.msra.mxu0 %v356
        %377 = vmatprep.subr.mxu0 0.0
        %378 = vmatpush1.msra.mxu0 0.0
        %379 = vmatprep.subr.mxu0 0.0
        %380 = vmatpush1.msra.mxu0 0.0
        %381 = vmatprep.subr.mxu0 0.0
        %382 = vmatpush1.msra.mxu0 0.0
        %383 = vmatprep.subr.mxu0 0.0
        %384 = vmatpush1.msra.mxu0 0.0
        %385 = vmatprep.subr.mxu0 0.0
        %386 = vmatpush1.msra.mxu0 0.0
        %387 = vmatprep.subr.mxu0 0.0
        %388 = vmatpush1.msra.mxu0 0.0
        %389 = vmatprep.subr.mxu0 0.0
        %390 = vmatpush1.msra.mxu0 0.0
        %391 = vmatprep.subr.mxu0 0.0
        %392 = vmatpush1.msra.mxu0 0.0
        %393 = vmatprep.subr.mxu0 0.0
        %394 = vmatpush1.msra.mxu0 0.0
        %395 = vmatprep.subr.mxu0 0.0
        %396 = vmatpush1.msra.mxu0 0.0
        %397 = vmatprep.subr.mxu0 0.0
        %398 = vmatpush1.msra.mxu0 0.0
        %399 = vmatprep.subr.mxu0 0.0
        %400 = vmatpush1.msra.mxu0 0.0
        %401 = vmatprep.subr.mxu0 0.0
        %402 = vmatpush1.msra.mxu0 0.0
        %403 = vmatprep.subr.mxu0 0.0
        %404 = vmatpush1.msra.mxu0 0.0
        %405 = vmatprep.subr.mxu0 0.0
        %406 = vmatpush1.msra.mxu0 0.0
        %407 = vmatprep.subr.mxu0 0.0
        %408 = vmatpush1.msra.mxu0 0.0
        %409 = vmatprep.subr.mxu0 0.0
        %410 = vmatpush1.msra.mxu0 0.0
        %411 = vmatprep.subr.mxu0 0.0
        %412 = vmatpush1.msra.mxu0 0.0
        %413 = vmatprep.subr.mxu0 0.0
        %414 = vmatpush1.msra.mxu0 0.0
        %415 = vmatprep.subr.mxu0 0.0
        %416 = vmatpush1.msra.mxu0 0.0
        %417 = vmatprep.subr.mxu0 0.0
        %418 = vmatpush1.msra.mxu0 0.0
        %419 = vmatprep.subr.mxu0 0.0
        %420 = vmatpush1.msra.mxu0 0.0
        %421 = vmatprep.subr.mxu0 0.0
        %422 = vmatpush1.msra.mxu0 0.0
        %423 = vmatprep.subr.mxu0 0.0
        %424 = vmatpush1.msra.mxu0 0.0
        %425 = vmatprep.subr.mxu0 0.0
        %426 = vmatpush1.msra.mxu0 0.0
        %427 = vmatprep.subr.mxu0 0.0
        %428 = vmatpush1.msra.mxu0 0.0
        %429 = vmatprep.subr.mxu0 0.0
        %430 = vmatpush1.msra.mxu0 0.0
        %431 = vmatprep.subr.mxu0 0.0
        %432 = vmatpush1.msra.mxu0 0.0
        %433 = vmatprep.subr.mxu0 0.0
        %434 = vmatpush1.msra.mxu0 0.0
        %435 = vmatprep.mubr.f32.mxu0 0.0
        %436 = vmatmul.mubr.f32.gmra.mrb[0].mxu0 %v367
        %v437 = vpop.f32.mrb[0].mxu0
        %v438 = vadd.f32 0.0, %v437
        %v439 = vpop.f32.mrb[0].mxu0
        %440 = vmatprep.mubr.f32.mxu0 0.0
        %441 = vmatmul.mubr.f32.gmra.mrb[0].mxu0 %v369
        %v442 = vpop.f32.mrb[0].mxu0
        %v443 = vadd.f32 0.0, %v442
        %v444 = vpop.f32.mrb[0].mxu0
        %445 = vdwg.mxu0
        %v446 = vsel %vm366, %v347, 0
        %v448 = vsel %vm366, %v348, 0
        %450 = vmatprep.subr.mxu0 0.0
        %451 = vmatpush1.msra.mxu0 %v350
        %452 = vmatprep.subr.mxu0 0.0
        %453 = vmatpush1.msra.mxu0 %v351
        %454 = vmatprep.subr.mxu0 0.0
        %455 = vmatpush1.msra.mxu0 %v352
        %456 = vmatprep.subr.mxu0 0.0
        %457 = vmatpush1.msra.mxu0 0.0
        %458 = vmatprep.subr.mxu0 0.0
        %459 = vmatpush1.msra.mxu0 0.0
        %460 = vmatprep.subr.mxu0 0.0
        %461 = vmatpush1.msra.mxu0 0.0
        %462 = vmatprep.subr.mxu0 0.0
        %463 = vmatpush1.msra.mxu0 0.0
        %464 = vmatprep.subr.mxu0 0.0
        %465 = vmatpush1.msra.mxu0 0.0
        %466 = vmatprep.subr.mxu0 0.0
        %467 = vmatpush1.msra.mxu0 0.0
        %468 = vmatprep.subr.mxu0 0.0
        %469 = vmatpush1.msra.mxu0 0.0
        %470 = vmatprep.subr.mxu0 0.0
        %471 = vmatpush1.msra.mxu0 0.0
        %472 = vmatprep.subr.mxu0 0.0
        %473 = vmatpush1.msra.mxu0 0.0
        %474 = vmatprep.subr.mxu0 0.0
        %475 = vmatpush1.msra.mxu0 0.0
        %476 = vmatprep.subr.mxu0 0.0
        %477 = vmatpush1.msra.mxu0 0.0
        %478 = vmatprep.subr.mxu0 0.0
        %479 = vmatpush1.msra.mxu0 0.0
        %480 = vmatprep.subr.mxu0 0.0
        %481 = vmatpush1.msra.mxu0 0.0
        %482 = vmatprep.subr.mxu0 0.0
        %483 = vmatpush1.msra.mxu0 0.0
        %484 = vmatprep.subr.mxu0 0.0
        %485 = vmatpush1.msra.mxu0 0.0
        %486 = vmatprep.subr.mxu0 0.0
        %487 = vmatpush1.msra.mxu0 0.0
        %488 = vmatprep.subr.mxu0 0.0
        %489 = vmatpush1.msra.mxu0 0.0
        %490 = vmatprep.subr.mxu0 0.0
        %491 = vmatpush1.msra.mxu0 0.0
        %492 = vmatprep.subr.mxu0 0.0
        %493 = vmatpush1.msra.mxu0 0.0
        %494 = vmatprep.subr.mxu0 0.0
        %495 = vmatpush1.msra.mxu0 0.0
        %496 = vmatprep.subr.mxu0 0.0
        %497 = vmatpush1.msra.mxu0 0.0
        %498 = vmatprep.subr.mxu0 0.0
        %499 = vmatpush1.msra.mxu0 0.0
        %500 = vmatprep.subr.mxu0 0.0
        %501 = vmatpush1.msra.mxu0 0.0
        %502 = vmatprep.subr.mxu0 0.0
        %503 = vmatpush1.msra.mxu0 0.0
        %504 = vmatprep.subr.mxu0 0.0
        %505 = vmatpush1.msra.mxu0 0.0
        %506 = vmatprep.subr.mxu0 0.0
        %507 = vmatpush1.msra.mxu0 0.0
        %508 = vmatprep.subr.mxu0 0.0
        %509 = vmatpush1.msra.mxu0 0.0
        %510 = vmatprep.subr.mxu0 0.0
        %511 = vmatpush1.msra.mxu0 0.0
        %512 = vmatprep.subr.mxu0 0.0
        %513 = vmatpush1.msra.mxu0 0.0
        %514 = vmatprep.mubr.f32.mxu0 0.0
        %515 = vmatmul.mubr.f32.gmra.mrb[0].mxu0 %v446
        %v516 = vpop.f32.mrb[0].mxu0
        %v517 = vadd.f32 %v438, %v516
        %v518 = vpop.f32.mrb[0].mxu0
        %519 = vmatprep.mubr.f32.mxu0 0.0
        %520 = vmatmul.mubr.f32.gmra.mrb[0].mxu0 %v448
        %v521 = vpop.f32.mrb[0].mxu0
        %v522 = vadd.f32 %v443, %v521
        %v523 = vpop.f32.mrb[0].mxu0
        %524 = vdwg.mxu0
        %s525 = scalar_lea.vmem [#allocation3], 48
        %v526 = vld [vmem:[%s525] sm:$0xff]
        %v527 = vld [vmem:[%s525 + $0x8] sm:$0xff]
        %v528 = vld [vmem:[%s525 + $0x10] sm:$0xff]
        %vm529 = vcmask 1045504
        %v530 = vrot.slane %v347, 2
        %v531 = vrot.slane %v348, 2
        %v532 = vsel %vm529, %v530, %v531
        %v533 = vrot.slane %v349, 2
        %v534 = vsel %vm529, %v531, %v533
        %v535 = vsel %vm366, %v532, 0
        %v537 = vsel %vm366, %v534, 0
        %539 = vmatprep.subr.mxu0 0.0
        %540 = vmatpush1.msra.mxu0 %v526
        %541 = vmatprep.subr.mxu0 0.0
        %542 = vmatpush1.msra.mxu0 %v527
        %543 = vmatprep.subr.mxu0 0.0
        %544 = vmatpush1.msra.mxu0 %v528
        %545 = vmatprep.subr.mxu0 0.0
        %546 = vmatpush1.msra.mxu0 0.0
        %547 = vmatprep.subr.mxu0 0.0
        %548 = vmatpush1.msra.mxu0 0.0
        %549 = vmatprep.subr.mxu0 0.0
        %550 = vmatpush1.msra.mxu0 0.0
        %551 = vmatprep.subr.mxu0 0.0
        %552 = vmatpush1.msra.mxu0 0.0
        %553 = vmatprep.subr.mxu0 0.0
        %554 = vmatpush1.msra.mxu0 0.0
        %555 = vmatprep.subr.mxu0 0.0
        %556 = vmatpush1.msra.mxu0 0.0
        %557 = vmatprep.subr.mxu0 0.0
        %558 = vmatpush1.msra.mxu0 0.0
        %559 = vmatprep.subr.mxu0 0.0
        %560 = vmatpush1.msra.mxu0 0.0
        %561 = vmatprep.subr.mxu0 0.0
        %562 = vmatpush1.msra.mxu0 0.0
        %563 = vmatprep.subr.mxu0 0.0
        %564 = vmatpush1.msra.mxu0 0.0
        %565 = vmatprep.subr.mxu0 0.0
        %566 = vmatpush1.msra.mxu0 0.0
        %567 = vmatprep.subr.mxu0 0.0
        %568 = vmatpush1.msra.mxu0 0.0
        %569 = vmatprep.subr.mxu0 0.0
        %570 = vmatpush1.msra.mxu0 0.0
        %571 = vmatprep.subr.mxu0 0.0
        %572 = vmatpush1.msra.mxu0 0.0
        %573 = vmatprep.subr.mxu0 0.0
        %574 = vmatpush1.msra.mxu0 0.0
        %575 = vmatprep.subr.mxu0 0.0
        %576 = vmatpush1.msra.mxu0 0.0
        %577 = vmatprep.subr.mxu0 0.0
        %578 = vmatpush1.msra.mxu0 0.0
        %579 = vmatprep.subr.mxu0 0.0
        %580 = vmatpush1.msra.mxu0 0.0
        %581 = vmatprep.subr.mxu0 0.0
        %582 = vmatpush1.msra.mxu0 0.0
        %583 = vmatprep.subr.mxu0 0.0
        %584 = vmatpush1.msra.mxu0 0.0
        %585 = vmatprep.subr.mxu0 0.0
        %586 = vmatpush1.msra.mxu0 0.0
        %587 = vmatprep.subr.mxu0 0.0
        %588 = vmatpush1.msra.mxu0 0.0
        %589 = vmatprep.subr.mxu0 0.0
        %590 = vmatpush1.msra.mxu0 0.0
        %591 = vmatprep.subr.mxu0 0.0
        %592 = vmatpush1.msra.mxu0 0.0
        %593 = vmatprep.subr.mxu0 0.0
        %594 = vmatpush1.msra.mxu0 0.0
        %595 = vmatprep.subr.mxu0 0.0
        %596 = vmatpush1.msra.mxu0 0.0
        %597 = vmatprep.subr.mxu0 0.0
        %598 = vmatpush1.msra.mxu0 0.0
        %599 = vmatprep.subr.mxu0 0.0
        %600 = vmatpush1.msra.mxu0 0.0
        %601 = vmatprep.subr.mxu0 0.0
        %602 = vmatpush1.msra.mxu0 0.0
        %603 = vmatprep.mubr.f32.mxu0 0.0
        %604 = vmatmul.mubr.f32.gmra.mrb[0].mxu0 %v535
        %v605 = vpop.f32.mrb[0].mxu0
        %v606 = vadd.f32 0.0, %v605
        %v607 = vpop.f32.mrb[0].mxu0
        %608 = vmatprep.mubr.f32.mxu0 0.0
        %609 = vmatmul.mubr.f32.gmra.mrb[0].mxu0 %v537
        %v610 = vpop.f32.mrb[0].mxu0
        %v611 = vadd.f32 0.0, %v610
        %v612 = vpop.f32.mrb[0].mxu0
        %613 = vdwg.mxu0
        %v614 = vadd.f32 %v517, %v606
        %v615 = vadd.f32 %v522, %v611
        %s616 = scalar_lea.vmem [#allocation3], 72
        %v617 = vld [vmem:[%s616] sm:$0xff]
        %v618 = vld [vmem:[%s616 + $0x8] sm:$0xff]
        %v619 = vld [vmem:[%s616 + $0x10] sm:$0xff]
        %vm620 = vcmask 1044480
        %v621 = vrot.slane %v347, 3
        %v622 = vrot.slane %v348, 3
        %v623 = vsel %vm620, %v621, %v622
        %v624 = vrot.slane %v349, 3
        %v625 = vsel %vm620, %v622, %v624
        %v626 = vsel %vm366, %v623, 0
        %v628 = vsel %vm366, %v625, 0
        %630 = vmatprep.subr.mxu0 0.0
        %631 = vmatpush1.msra.mxu0 %v617
        %632 = vmatprep.subr.mxu0 0.0
        %633 = vmatpush1.msra.mxu0 %v618
        %634 = vmatprep.subr.mxu0 0.0
        %635 = vmatpush1.msra.mxu0 %v619
        %636 = vmatprep.subr.mxu0 0.0
        %637 = vmatpush1.msra.mxu0 0.0
        %638 = vmatprep.subr.mxu0 0.0
        %639 = vmatpush1.msra.mxu0 0.0
        %640 = vmatprep.subr.mxu0 0.0
        %641 = vmatpush1.msra.mxu0 0.0
        %642 = vmatprep.subr.mxu0 0.0
        %643 = vmatpush1.msra.mxu0 0.0
        %644 = vmatprep.subr.mxu0 0.0
        %645 = vmatpush1.msra.mxu0 0.0
        %646 = vmatprep.subr.mxu0 0.0
        %647 = vmatpush1.msra.mxu0 0.0
        %648 = vmatprep.subr.mxu0 0.0
        %649 = vmatpush1.msra.mxu0 0.0
        %650 = vmatprep.subr.mxu0 0.0
        %651 = vmatpush1.msra.mxu0 0.0
        %652 = vmatprep.subr.mxu0 0.0
        %653 = vmatpush1.msra.mxu0 0.0
        %654 = vmatprep.subr.mxu0 0.0
        %655 = vmatpush1.msra.mxu0 0.0
        %656 = vmatprep.subr.mxu0 0.0
        %657 = vmatpush1.msra.mxu0 0.0
        %658 = vmatprep.subr.mxu0 0.0
        %659 = vmatpush1.msra.mxu0 0.0
        %660 = vmatprep.subr.mxu0 0.0
        %661 = vmatpush1.msra.mxu0 0.0
        %662 = vmatprep.subr.mxu0 0.0
        %663 = vmatpush1.msra.mxu0 0.0
        %664 = vmatprep.subr.mxu0 0.0
        %665 = vmatpush1.msra.mxu0 0.0
        %666 = vmatprep.subr.mxu0 0.0
        %667 = vmatpush1.msra.mxu0 0.0
        %668 = vmatprep.subr.mxu0 0.0
        %669 = vmatpush1.msra.mxu0 0.0
        %670 = vmatprep.subr.mxu0 0.0
        %671 = vmatpush1.msra.mxu0 0.0
        %672 = vmatprep.subr.mxu0 0.0
        %673 = vmatpush1.msra.mxu0 0.0
        %674 = vmatprep.subr.mxu0 0.0
        %675 = vmatpush1.msra.mxu0 0.0
        %676 = vmatprep.subr.mxu0 0.0
        %677 = vmatpush1.msra.mxu0 0.0
        %678 = vmatprep.subr.mxu0 0.0
        %679 = vmatpush1.msra.mxu0 0.0
        %680 = vmatprep.subr.mxu0 0.0
        %681 = vmatpush1.msra.mxu0 0.0
        %682 = vmatprep.subr.mxu0 0.0
        %683 = vmatpush1.msra.mxu0 0.0
        %684 = vmatprep.subr.mxu0 0.0
        %685 = vmatpush1.msra.mxu0 0.0
        %686 = vmatprep.subr.mxu0 0.0
        %687 = vmatpush1.msra.mxu0 0.0
        %688 = vmatprep.subr.mxu0 0.0
        %689 = vmatpush1.msra.mxu0 0.0
        %690 = vmatprep.subr.mxu0 0.0
        %691 = vmatpush1.msra.mxu0 0.0
        %692 = vmatprep.subr.mxu0 0.0
        %693 = vmatpush1.msra.mxu0 0.0
        %694 = vmatprep.mubr.f32.mxu0 0.0
        %695 = vmatmul.mubr.f32.gmra.mrb[0].mxu0 %v626
        %v696 = vpop.f32.mrb[0].mxu0
        %v697 = vadd.f32 0.0, %v696
        %v698 = vpop.f32.mrb[0].mxu0
        %699 = vmatprep.mubr.f32.mxu0 0.0
        %700 = vmatmul.mubr.f32.gmra.mrb[0].mxu0 %v628
        %v701 = vpop.f32.mrb[0].mxu0
        %v702 = vadd.f32 0.0, %v701
        %v703 = vpop.f32.mrb[0].mxu0
        %704 = vdwg.mxu0
        %v705 = vadd.f32 %v614, %v697
        %v706 = vadd.f32 %v615, %v702
        %s707 = scalar_lea.vmem [#allocation3], 96
        %v708 = vld [vmem:[%s707] sm:$0xff]
        %v709 = vld [vmem:[%s707 + $0x8] sm:$0xff]
        %v710 = vld [vmem:[%s707 + $0x10] sm:$0xff]
        %vm711 = vcmask 1043456
        %v712 = vrot.slane %v347, 4
        %v713 = vrot.slane %v348, 4
        %v714 = vsel %vm711, %v712, %v713
        %v715 = vrot.slane %v349, 4
        %v716 = vsel %vm711, %v713, %v715
        %v717 = vsel %vm366, %v714, 0
        %v719 = vsel %vm366, %v716, 0
        %721 = vmatprep.subr.mxu0 0.0
        %722 = vmatpush1.msra.mxu0 %v708
        %723 = vmatprep.subr.mxu0 0.0
        %724 = vmatpush1.msra.mxu0 %v709
        %725 = vmatprep.subr.mxu0 0.0
        %726 = vmatpush1.msra.mxu0 %v710
        %727 = vmatprep.subr.mxu0 0.0
        %728 = vmatpush1.msra.mxu0 0.0
        %729 = vmatprep.subr.mxu0 0.0
        %730 = vmatpush1.msra.mxu0 0.0
        %731 = vmatprep.subr.mxu0 0.0
        %732 = vmatpush1.msra.mxu0 0.0
        %733 = vmatprep.subr.mxu0 0.0
        %734 = vmatpush1.msra.mxu0 0.0
        %735 = vmatprep.subr.mxu0 0.0
        %736 = vmatpush1.msra.mxu0 0.0
        %737 = vmatprep.subr.mxu0 0.0
        %738 = vmatpush1.msra.mxu0 0.0
        %739 = vmatprep.subr.mxu0 0.0
        %740 = vmatpush1.msra.mxu0 0.0
        %741 = vmatprep.subr.mxu0 0.0
        %742 = vmatpush1.msra.mxu0 0.0
        %743 = vmatprep.subr.mxu0 0.0
        %744 = vmatpush1.msra.mxu0 0.0
        %745 = vmatprep.subr.mxu0 0.0
        %746 = vmatpush1.msra.mxu0 0.0
        %747 = vmatprep.subr.mxu0 0.0
        %748 = vmatpush1.msra.mxu0 0.0
        %749 = vmatprep.subr.mxu0 0.0
        %750 = vmatpush1.msra.mxu0 0.0
        %751 = vmatprep.subr.mxu0 0.0
        %752 = vmatpush1.msra.mxu0 0.0
        %753 = vmatprep.subr.mxu0 0.0
        %754 = vmatpush1.msra.mxu0 0.0
        %755 = vmatprep.subr.mxu0 0.0
        %756 = vmatpush1.msra.mxu0 0.0
        %757 = vmatprep.subr.mxu0 0.0
        %758 = vmatpush1.msra.mxu0 0.0
        %759 = vmatprep.subr.mxu0 0.0
        %760 = vmatpush1.msra.mxu0 0.0
        %761 = vmatprep.subr.mxu0 0.0
        %762 = vmatpush1.msra.mxu0 0.0
        %763 = vmatprep.subr.mxu0 0.0
        %764 = vmatpush1.msra.mxu0 0.0
        %765 = vmatprep.subr.mxu0 0.0
        %766 = vmatpush1.msra.mxu0 0.0
        %767 = vmatprep.subr.mxu0 0.0
        %768 = vmatpush1.msra.mxu0 0.0
        %769 = vmatprep.subr.mxu0 0.0
        %770 = vmatpush1.msra.mxu0 0.0
        %771 = vmatprep.subr.mxu0 0.0
        %772 = vmatpush1.msra.mxu0 0.0
        %773 = vmatprep.subr.mxu0 0.0
        %774 = vmatpush1.msra.mxu0 0.0
        %775 = vmatprep.subr.mxu0 0.0
        %776 = vmatpush1.msra.mxu0 0.0
        %777 = vmatprep.subr.mxu0 0.0
        %778 = vmatpush1.msra.mxu0 0.0
        %779 = vmatprep.subr.mxu0 0.0
        %780 = vmatpush1.msra.mxu0 0.0
        %781 = vmatprep.subr.mxu0 0.0
        %782 = vmatpush1.msra.mxu0 0.0
        %783 = vmatprep.subr.mxu0 0.0
        %784 = vmatpush1.msra.mxu0 0.0
        %785 = vmatprep.mubr.f32.mxu0 0.0
        %786 = vmatmul.mubr.f32.gmra.mrb[0].mxu0 %v717
        %v787 = vpop.f32.mrb[0].mxu0
        %v788 = vadd.f32 0.0, %v787
        %v789 = vpop.f32.mrb[0].mxu0
        %790 = vmatprep.mubr.f32.mxu0 0.0
        %791 = vmatmul.mubr.f32.gmra.mrb[0].mxu0 %v719
        %v792 = vpop.f32.mrb[0].mxu0
        %v793 = vadd.f32 0.0, %v792
        %v794 = vpop.f32.mrb[0].mxu0
        %795 = vdwg.mxu0
        %v796 = vadd.f32 %v705, %v788
        %v797 = vadd.f32 %v706, %v793
        %s798 = scalar_lea.vmem [#allocation3], 120
        %v799 = vld [vmem:[%s798] sm:$0xff]
        %v800 = vld [vmem:[%s798 + $0x8] sm:$0xff]
        %v801 = vld [vmem:[%s798 + $0x10] sm:$0xff]
        %vm802 = vcmask 1042432
        %v803 = vrot.slane %v347, 5
        %v804 = vrot.slane %v348, 5
        %v805 = vsel %vm802, %v803, %v804
        %v806 = vrot.slane %v349, 5
        %v807 = vsel %vm802, %v804, %v806
        %v808 = vsel %vm366, %v805, 0
        %v810 = vsel %vm366, %v807, 0
        %812 = vmatprep.subr.mxu0 0.0
        %813 = vmatpush1.msra.mxu0 %v799
        %814 = vmatprep.subr.mxu0 0.0
        %815 = vmatpush1.msra.mxu0 %v800
        %816 = vmatprep.subr.mxu0 0.0
        %817 = vmatpush1.msra.mxu0 %v801
        %818 = vmatprep.subr.mxu0 0.0
        %819 = vmatpush1.msra.mxu0 0.0
        %820 = vmatprep.subr.mxu0 0.0
        %821 = vmatpush1.msra.mxu0 0.0
        %822 = vmatprep.subr.mxu0 0.0
        %823 = vmatpush1.msra.mxu0 0.0
        %824 = vmatprep.subr.mxu0 0.0
        %825 = vmatpush1.msra.mxu0 0.0
        %826 = vmatprep.subr.mxu0 0.0
        %827 = vmatpush1.msra.mxu0 0.0
        %828 = vmatprep.subr.mxu0 0.0
        %829 = vmatpush1.msra.mxu0 0.0
        %830 = vmatprep.subr.mxu0 0.0
        %831 = vmatpush1.msra.mxu0 0.0
        %832 = vmatprep.subr.mxu0 0.0
        %833 = vmatpush1.msra.mxu0 0.0
        %834 = vmatprep.subr.mxu0 0.0
        %835 = vmatpush1.msra.mxu0 0.0
        %836 = vmatprep.subr.mxu0 0.0
        %837 = vmatpush1.msra.mxu0 0.0
        %838 = vmatprep.subr.mxu0 0.0
        %839 = vmatpush1.msra.mxu0 0.0
        %840 = vmatprep.subr.mxu0 0.0
        %841 = vmatpush1.msra.mxu0 0.0
        %842 = vmatprep.subr.mxu0 0.0
        %843 = vmatpush1.msra.mxu0 0.0
        %844 = vmatprep.subr.mxu0 0.0
        %845 = vmatpush1.msra.mxu0 0.0
        %846 = vmatprep.subr.mxu0 0.0
        %847 = vmatpush1.msra.mxu0 0.0
        %848 = vmatprep.subr.mxu0 0.0
        %849 = vmatpush1.msra.mxu0 0.0
        %850 = vmatprep.subr.mxu0 0.0
        %851 = vmatpush1.msra.mxu0 0.0
        %852 = vmatprep.subr.mxu0 0.0
        %853 = vmatpush1.msra.mxu0 0.0
        %854 = vmatprep.subr.mxu0 0.0
        %855 = vmatpush1.msra.mxu0 0.0
        %856 = vmatprep.subr.mxu0 0.0
        %857 = vmatpush1.msra.mxu0 0.0
        %858 = vmatprep.subr.mxu0 0.0
        %859 = vmatpush1.msra.mxu0 0.0
        %860 = vmatprep.subr.mxu0 0.0
        %861 = vmatpush1.msra.mxu0 0.0
        %862 = vmatprep.subr.mxu0 0.0
        %863 = vmatpush1.msra.mxu0 0.0
        %864 = vmatprep.subr.mxu0 0.0
        %865 = vmatpush1.msra.mxu0 0.0
        %866 = vmatprep.subr.mxu0 0.0
        %867 = vmatpush1.msra.mxu0 0.0
        %868 = vmatprep.subr.mxu0 0.0
        %869 = vmatpush1.msra.mxu0 0.0
        %870 = vmatprep.subr.mxu0 0.0
        %871 = vmatpush1.msra.mxu0 0.0
        %872 = vmatprep.subr.mxu0 0.0
        %873 = vmatpush1.msra.mxu0 0.0
        %874 = vmatprep.subr.mxu0 0.0
        %875 = vmatpush1.msra.mxu0 0.0
        %876 = vmatprep.mubr.f32.mxu0 0.0
        %877 = vmatmul.mubr.f32.gmra.mrb[0].mxu0 %v808
        %v878 = vpop.f32.mrb[0].mxu0
        %v879 = vadd.f32 0.0, %v878
        %v880 = vpop.f32.mrb[0].mxu0
        %881 = vmatprep.mubr.f32.mxu0 0.0
        %882 = vmatmul.mubr.f32.gmra.mrb[0].mxu0 %v810
        %v883 = vpop.f32.mrb[0].mxu0
        %v884 = vadd.f32 0.0, %v883
        %v885 = vpop.f32.mrb[0].mxu0
        %886 = vdwg.mxu0
        %v887 = vadd.f32 %v796, %v879
        %v888 = vadd.f32 %v797, %v884
        %s889 = scalar_lea.vmem [#allocation3], 144
        %v890 = vld [vmem:[%s889] sm:$0xff]
        %v891 = vld [vmem:[%s889 + $0x8] sm:$0xff]
        %v892 = vld [vmem:[%s889 + $0x10] sm:$0xff]
        %vm893 = vcmask 1041408
        %v894 = vrot.slane %v347, 6
        %v895 = vrot.slane %v348, 6
        %v896 = vsel %vm893, %v894, %v895
        %v897 = vrot.slane %v349, 6
        %v898 = vsel %vm893, %v895, %v897
        %v899 = vsel %vm366, %v896, 0
        %v901 = vsel %vm366, %v898, 0
        %903 = vmatprep.subr.mxu0 0.0
        %904 = vmatpush1.msra.mxu0 %v890
        %905 = vmatprep.subr.mxu0 0.0
        %906 = vmatpush1.msra.mxu0 %v891
        %907 = vmatprep.subr.mxu0 0.0
        %908 = vmatpush1.msra.mxu0 %v892
        %909 = vmatprep.subr.mxu0 0.0
        %910 = vmatpush1.msra.mxu0 0.0
        %911 = vmatprep.subr.mxu0 0.0
        %912 = vmatpush1.msra.mxu0 0.0
        %913 = vmatprep.subr.mxu0 0.0
        %914 = vmatpush1.msra.mxu0 0.0
        %915 = vmatprep.subr.mxu0 0.0
        %916 = vmatpush1.msra.mxu0 0.0
        %917 = vmatprep.subr.mxu0 0.0
        %918 = vmatpush1.msra.mxu0 0.0
        %919 = vmatprep.subr.mxu0 0.0
        %920 = vmatpush1.msra.mxu0 0.0
        %921 = vmatprep.subr.mxu0 0.0
        %922 = vmatpush1.msra.mxu0 0.0
        %923 = vmatprep.subr.mxu0 0.0
        %924 = vmatpush1.msra.mxu0 0.0
        %925 = vmatprep.subr.mxu0 0.0
        %926 = vmatpush1.msra.mxu0 0.0
        %927 = vmatprep.subr.mxu0 0.0
        %928 = vmatpush1.msra.mxu0 0.0
        %929 = vmatprep.subr.mxu0 0.0
        %930 = vmatpush1.msra.mxu0 0.0
        %931 = vmatprep.subr.mxu0 0.0
        %932 = vmatpush1.msra.mxu0 0.0
        %933 = vmatprep.subr.mxu0 0.0
        %934 = vmatpush1.msra.mxu0 0.0
        %935 = vmatprep.subr.mxu0 0.0
        %936 = vmatpush1.msra.mxu0 0.0
        %937 = vmatprep.subr.mxu0 0.0
        %938 = vmatpush1.msra.mxu0 0.0
        %939 = vmatprep.subr.mxu0 0.0
        %940 = vmatpush1.msra.mxu0 0.0
        %941 = vmatprep.subr.mxu0 0.0
        %942 = vmatpush1.msra.mxu0 0.0
        %943 = vmatprep.subr.mxu0 0.0
        %944 = vmatpush1.msra.mxu0 0.0
        %945 = vmatprep.subr.mxu0 0.0
        %946 = vmatpush1.msra.mxu0 0.0
        %947 = vmatprep.subr.mxu0 0.0
        %948 = vmatpush1.msra.mxu0 0.0
        %949 = vmatprep.subr.mxu0 0.0
        %950 = vmatpush1.msra.mxu0 0.0
        %951 = vmatprep.subr.mxu0 0.0
        %952 = vmatpush1.msra.mxu0 0.0
        %953 = vmatprep.subr.mxu0 0.0
        %954 = vmatpush1.msra.mxu0 0.0
        %955 = vmatprep.subr.mxu0 0.0
        %956 = vmatpush1.msra.mxu0 0.0
        %957 = vmatprep.subr.mxu0 0.0
        %958 = vmatpush1.msra.mxu0 0.0
        %959 = vmatprep.subr.mxu0 0.0
        %960 = vmatpush1.msra.mxu0 0.0
        %961 = vmatprep.subr.mxu0 0.0
        %962 = vmatpush1.msra.mxu0 0.0
        %963 = vmatprep.subr.mxu0 0.0
        %964 = vmatpush1.msra.mxu0 0.0
        %965 = vmatprep.subr.mxu0 0.0
        %966 = vmatpush1.msra.mxu0 0.0
        %967 = vmatprep.mubr.f32.mxu0 0.0
        %968 = vmatmul.mubr.f32.gmra.mrb[0].mxu0 %v899
        %v969 = vpop.f32.mrb[0].mxu0
        %v970 = vadd.f32 0.0, %v969
        %v971 = vpop.f32.mrb[0].mxu0
        %972 = vmatprep.mubr.f32.mxu0 0.0
        %973 = vmatmul.mubr.f32.gmra.mrb[0].mxu0 %v901
        %v974 = vpop.f32.mrb[0].mxu0
        %v975 = vadd.f32 0.0, %v974
        %v976 = vpop.f32.mrb[0].mxu0
        %977 = vdwg.mxu0
        %v978 = vadd.f32 %v887, %v970
        %v979 = vadd.f32 %v888, %v975
        %v980 = vld [vmem:[%s2] sm:$0x1]
        %v982 = vlaneseq
        %v983 = vshrl.u32 %v982, 7
        %v984 = vsub.s32 0, %v983
        %v985 = vrot.slane %v980, %v984
        %v987 = vadd.f32 %v978, %v985
        %v988 = vadd.f32 %v979, %v985
        %v989 = vmax.f32 %v987, 0.0
        %v990 = vmax.f32 %v988, 0.0
        %v991 = vld [vmem:[%s3] sm:$0xff]
        %v992 = vld [vmem:[%s3 + $0x8] sm:$0xff]
        %v993 = vld [vmem:[%s3 + $0x10] sm:$0xff]
        %v994 = vld [vmem:[%s3 + $0x18] sm:$0xff]
        %v995 = vld [vmem:[%s4] sm:$0x1]
        %v997 = vlaneseq
        %v998 = vshrl.u32 %v997, 7
        %v999 = vsub.s32 0, %v998
        %v1000 = vrot.slane %v995, %v999
        %vm1002 = vcmask 261120
        %v1004 = vsel %vm1002, %v989, 0
        %v1007 = vsel %vm1002, %v990, 0
        %1009 = vmatprep.subr.mxu0 0.0
        %1010 = vmatpush1.msra.mxu0 %v991
        %1011 = vmatprep.subr.mxu0 0.0
        %1012 = vmatpush1.msra.mxu0 %v992
        %1013 = vmatprep.subr.mxu0 0.0
        %1014 = vmatpush1.msra.mxu0 %v993
        %1015 = vmatprep.subr.mxu0 0.0
        %1016 = vmatpush1.msra.mxu0 %v994
        %1017 = vmatprep.subr.mxu0 0.0
        %1018 = vmatpush1.msra.mxu0 0.0
        %1019 = vmatprep.subr.mxu0 0.0
        %1020 = vmatpush1.msra.mxu0 0.0
        %1021 = vmatprep.subr.mxu0 0.0
        %1022 = vmatpush1.msra.mxu0 0.0
        %1023 = vmatprep.subr.mxu0 0.0
        %1024 = vmatpush1.msra.mxu0 0.0
        %1025 = vmatprep.subr.mxu0 0.0
        %1026 = vmatpush1.msra.mxu0 0.0
        %1027 = vmatprep.subr.mxu0 0.0
        %1028 = vmatpush1.msra.mxu0 0.0
        %1029 = vmatprep.subr.mxu0 0.0
        %1030 = vmatpush1.msra.mxu0 0.0
        %1031 = vmatprep.subr.mxu0 0.0
        %1032 = vmatpush1.msra.mxu0 0.0
        %1033 = vmatprep.subr.mxu0 0.0
        %1034 = vmatpush1.msra.mxu0 0.0
        %1035 = vmatprep.subr.mxu0 0.0
        %1036 = vmatpush1.msra.mxu0 0.0
        %1037 = vmatprep.subr.mxu0 0.0
        %1038 = vmatpush1.msra.mxu0 0.0
        %1039 = vmatprep.subr.mxu0 0.0
        %1040 = vmatpush1.msra.mxu0 0.0
        %1041 = vmatprep.subr.mxu0 0.0
        %1042 = vmatpush1.msra.mxu0 0.0
        %1043 = vmatprep.subr.mxu0 0.0
        %1044 = vmatpush1.msra.mxu0 0.0
        %1045 = vmatprep.subr.mxu0 0.0
        %1046 = vmatpush1.msra.mxu0 0.0
        %1047 = vmatprep.subr.mxu0 0.0
        %1048 = vmatpush1.msra.mxu0 0.0
        %1049 = vmatprep.subr.mxu0 0.0
        %1050 = vmatpush1.msra.mxu0 0.0
        %1051 = vmatprep.subr.mxu0 0.0
        %1052 = vmatpush1.msra.mxu0 0.0
        %1053 = vmatprep.subr.mxu0 0.0
        %1054 = vmatpush1.msra.mxu0 0.0
        %1055 = vmatprep.subr.mxu0 0.0
        %1056 = vmatpush1.msra.mxu0 0.0
        %1057 = vmatprep.subr.mxu0 0.0
        %1058 = vmatpush1.msra.mxu0 0.0
        %1059 = vmatprep.subr.mxu0 0.0
        %1060 = vmatpush1.msra.mxu0 0.0
        %1061 = vmatprep.subr.mxu0 0.0
        %1062 = vmatpush1.msra.mxu0 0.0
        %1063 = vmatprep.subr.mxu0 0.0
        %1064 = vmatpush1.msra.mxu0 0.0
        %1065 = vmatprep.subr.mxu0 0.0
        %1066 = vmatpush1.msra.mxu0 0.0
        %1067 = vmatprep.subr.mxu0 0.0
        %1068 = vmatpush1.msra.mxu0 0.0
        %1069 = vmatprep.subr.mxu0 0.0
        %1070 = vmatpush1.msra.mxu0 0.0
        %1071 = vmatprep.subr.mxu0 0.0
        %1072 = vmatpush1.msra.mxu0 0.0
        %1073 = vmatprep.mubr.f32.mxu0 0.0
        %1074 = vmatmul.mubr.f32.gmra.mrb[0].mxu0 %v1004
        %v1075 = vpop.f32.mrb[0].mxu0
        %v1076 = vadd.f32 %v1000, %v1075
        %v1077 = vpop.f32.mrb[0].mxu0
        %1078 = vmatprep.mubr.f32.mxu0 0.0
        %1079 = vmatmul.mubr.f32.gmra.mrb[0].mxu0 %v1007
        %v1080 = vpop.f32.mrb[0].mxu0
        %v1081 = vadd.f32 %v1000, %v1080
        %v1082 = vpop.f32.mrb[0].mxu0
        %1083 = vdwg.mxu0
        %1084 = vst.msk [vmem:[#allocation2] sm:$0xff] %vm366, %v1076
        %1085 = vst.msk [vmem:[#allocation2 + $0x8] sm:$0xff] %vm366, %v1081
        %1088 = vrot.lane.b32.xlu0 %v1076, 104
        %v1089 = vpop.permute.xlu0 %1088
        %1090 = vrot.lane.b32.xlu0 %v1081, 104
        %v1091 = vpop.permute.xlu0 %1090
        %s1094 = scalar_lea.vmem [#allocation2], 16
        %1095 = vst.msk [vmem:[%s1094] sm:$0xff] %vm366, %v1089
        %1096 = vst.msk [vmem:[%s1094 + $0x8] sm:$0xff] %vm366, %v1091
        %1097 = vrot.lane.b32.xlu0 %v1076, 80
        %v1098 = vpop.permute.xlu0 %1097
        %1099 = vrot.lane.b32.xlu0 %v1081, 80
        %v1100 = vpop.permute.xlu0 %1099
        %s1103 = scalar_lea.vmem [#allocation2], 32
        %1104 = vst.msk [vmem:[%s1103] sm:$0xff] %vm366, %v1098
        %1105 = vst.msk [vmem:[%s1103 + $0x8] sm:$0xff] %vm366, %v1100
        %1106 = vrot.lane.b32.xlu0 %v1076, 56
        %v1107 = vpop.permute.xlu0 %1106
        %1108 = vrot.lane.b32.xlu0 %v1081, 56
        %v1109 = vpop.permute.xlu0 %1108
        %s1112 = scalar_lea.vmem [#allocation2], 48
        %1113 = vst.msk [vmem:[%s1112] sm:$0xff] %vm366, %v1107
        %1114 = vst.msk [vmem:[%s1112 + $0x8] sm:$0xff] %vm366, %v1109
        %v1115 = vld [vmem:[#allocation2] sm:$0xff]
        %v1116 = vld [vmem:[#allocation2 + $0x8] sm:$0xff]
        %v1117 = vld [vmem:[#allocation2 + $0x10] sm:$0xff]
        %v1118 = vld [vmem:[#allocation2 + $0x18] sm:$0xff]
        %v1119 = vld [vmem:[#allocation2 + $0x20] sm:$0xff]
        %v1120 = vld [vmem:[#allocation2 + $0x28] sm:$0xff]
        %v1121 = vld [vmem:[#allocation2 + $0x30] sm:$0xff]
        %v1122 = vld [vmem:[#allocation2 + $0x38] sm:$0xff]
        %1125 = vrot.lane.b32.xlu0 %v1115, 120
        %v1126 = vpop.permute.xlu0 %1125
        %1127 = vrot.lane.b32.xlu0 %v1116, 120
        %v1128 = vpop.permute.xlu0 %1127
        %vm1129 = vcmask 64512
        %v1130 = vsel %vm1129, %v1115, 0
        %v1132 = vsel %vm1129, %v1116, 0
        %v1134 = vsel %vm1129, %v1126, 0
        %v1136 = vsel %vm1129, %v1128, 0
        %1138 = vmatprep.subr.mxu0 0.0
        %1139 = vmatpush1.xpose.msra.mxu0 %v1134
        %1140 = vmatprep.subr.mxu0 0.0
        %1141 = vmatpush1.xpose.msra.mxu0 %v1136
        %1142 = vmatprep.subr.mxu0 0.0
        %1143 = vmatpush1.xpose.msra.mxu0 0.0
        %1144 = vmatprep.subr.mxu0 0.0
        %1145 = vmatpush1.xpose.msra.mxu0 0.0
        %1146 = vmatprep.subr.mxu0 0.0
        %1147 = vmatpush1.xpose.msra.mxu0 0.0
        %1148 = vmatprep.subr.mxu0 0.0
        %1149 = vmatpush1.xpose.msra.mxu0 0.0
        %1150 = vmatprep.subr.mxu0 0.0
        %1151 = vmatpush1.xpose.msra.mxu0 0.0
        %1152 = vmatprep.subr.mxu0 0.0
        %1153 = vmatpush1.xpose.msra.mxu0 0.0
        %1154 = vmatprep.subr.mxu0 0.0
        %1155 = vmatpush1.xpose.msra.mxu0 0.0
        %1156 = vmatprep.subr.mxu0 0.0
        %1157 = vmatpush1.xpose.msra.mxu0 0.0
        %1158 = vmatprep.subr.mxu0 0.0
        %1159 = vmatpush1.xpose.msra.mxu0 0.0
        %1160 = vmatprep.subr.mxu0 0.0
        %1161 = vmatpush1.xpose.msra.mxu0 0.0
        %1162 = vmatprep.subr.mxu0 0.0
        %1163 = vmatpush1.xpose.msra.mxu0 0.0
        %1164 = vmatprep.subr.mxu0 0.0
        %1165 = vmatpush1.xpose.msra.mxu0 0.0
        %1166 = vmatprep.subr.mxu0 0.0
        %1167 = vmatpush1.xpose.msra.mxu0 0.0
        %1168 = vmatprep.subr.mxu0 0.0
        %1169 = vmatpush1.xpose.msra.mxu0 0.0
        %1170 = vmatprep.subr.mxu0 0.0
        %1171 = vmatpush1.xpose.msra.mxu0 0.0
        %1172 = vmatprep.subr.mxu0 0.0
        %1173 = vmatpush1.xpose.msra.mxu0 0.0
        %1174 = vmatprep.subr.mxu0 0.0
        %1175 = vmatpush1.xpose.msra.mxu0 0.0
        %1176 = vmatprep.subr.mxu0 0.0
        %1177 = vmatpush1.xpose.msra.mxu0 0.0
        %1178 = vmatprep.subr.mxu0 0.0
        %1179 = vmatpush1.xpose.msra.mxu0 0.0
        %1180 = vmatprep.subr.mxu0 0.0
        %1181 = vmatpush1.xpose.msra.mxu0 0.0
        %1182 = vmatprep.subr.mxu0 0.0
        %1183 = vmatpush1.xpose.msra.mxu0 0.0
        %1184 = vmatprep.subr.mxu0 0.0
        %1185 = vmatpush1.xpose.msra.mxu0 0.0
        %1186 = vmatprep.subr.mxu0 0.0
        %1187 = vmatpush1.xpose.msra.mxu0 0.0
        %1188 = vmatprep.subr.mxu0 0.0
        %1189 = vmatpush1.xpose.msra.mxu0 0.0
        %1190 = vmatprep.subr.mxu0 0.0
        %1191 = vmatpush1.xpose.msra.mxu0 0.0
        %1192 = vmatprep.subr.mxu0 0.0
        %1193 = vmatpush1.xpose.msra.mxu0 0.0
        %1194 = vmatprep.subr.mxu0 0.0
        %1195 = vmatpush1.xpose.msra.mxu0 0.0
        %1196 = vmatprep.subr.mxu0 0.0
        %1197 = vmatpush1.xpose.msra.mxu0 0.0
        %1198 = vmatprep.subr.mxu0 0.0
        %1199 = vmatpush1.xpose.msra.mxu0 0.0
        %1200 = vmatprep.subr.mxu0 0.0
        %1201 = vmatpush1.xpose.msra.mxu0 0.0
        %1202 = vmatprep.mubr.f32.mxu0 0.0
        %1203 = vmatmul.mubr.f32.gmra.mrb[0].mxu0 %v1130
        %v1204 = vpop.f32.mrb[0].mxu0
        %v1205 = vadd.f32 0.0, %v1204
        %v1206 = vpop.f32.mrb[0].mxu0
        %1207 = vmatprep.mubr.f32.mxu0 0.0
        %1208 = vmatmul.mubr.f32.gmra.mrb[0].mxu0 %v1132
        %v1209 = vpop.f32.mrb[0].mxu0
        %v1210 = vadd.f32 0.0, %v1209
        %v1211 = vpop.f32.mrb[0].mxu0
        %1212 = vdwg.mxu0
        %1215 = vrot.lane.b32.xlu0 %v1117, 120
        %v1216 = vpop.permute.xlu0 %1215
        %1217 = vrot.lane.b32.xlu0 %v1118, 120
        %v1218 = vpop.permute.xlu0 %1217
        %v1219 = vsel %vm1129, %v1117, 0
        %v1221 = vsel %vm1129, %v1118, 0
        %v1223 = vsel %vm1129, %v1216, 0
        %v1225 = vsel %vm1129, %v1218, 0
        %1227 = vmatprep.subr.mxu0 0.0
        %1228 = vmatpush1.xpose.msra.mxu0 %v1223
        %1229 = vmatprep.subr.mxu0 0.0
        %1230 = vmatpush1.xpose.msra.mxu0 %v1225
        %1231 = vmatprep.subr.mxu0 0.0
        %1232 = vmatpush1.xpose.msra.mxu0 0.0
        %1233 = vmatprep.subr.mxu0 0.0
        %1234 = vmatpush1.xpose.msra.mxu0 0.0
        %1235 = vmatprep.subr.mxu0 0.0
        %1236 = vmatpush1.xpose.msra.mxu0 0.0
        %1237 = vmatprep.subr.mxu0 0.0
        %1238 = vmatpush1.xpose.msra.mxu0 0.0
        %1239 = vmatprep.subr.mxu0 0.0
        %1240 = vmatpush1.xpose.msra.mxu0 0.0
        %1241 = vmatprep.subr.mxu0 0.0
        %1242 = vmatpush1.xpose.msra.mxu0 0.0
        %1243 = vmatprep.subr.mxu0 0.0
        %1244 = vmatpush1.xpose.msra.mxu0 0.0
        %1245 = vmatprep.subr.mxu0 0.0
        %1246 = vmatpush1.xpose.msra.mxu0 0.0
        %1247 = vmatprep.subr.mxu0 0.0
        %1248 = vmatpush1.xpose.msra.mxu0 0.0
        %1249 = vmatprep.subr.mxu0 0.0
        %1250 = vmatpush1.xpose.msra.mxu0 0.0
        %1251 = vmatprep.subr.mxu0 0.0
        %1252 = vmatpush1.xpose.msra.mxu0 0.0
        %1253 = vmatprep.subr.mxu0 0.0
        %1254 = vmatpush1.xpose.msra.mxu0 0.0
        %1255 = vmatprep.subr.mxu0 0.0
        %1256 = vmatpush1.xpose.msra.mxu0 0.0
        %1257 = vmatprep.subr.mxu0 0.0
        %1258 = vmatpush1.xpose.msra.mxu0 0.0
        %1259 = vmatprep.subr.mxu0 0.0
        %1260 = vmatpush1.xpose.msra.mxu0 0.0
        %1261 = vmatprep.subr.mxu0 0.0
        %1262 = vmatpush1.xpose.msra.mxu0 0.0
        %1263 = vmatprep.subr.mxu0 0.0
        %1264 = vmatpush1.xpose.msra.mxu0 0.0
        %1265 = vmatprep.subr.mxu0 0.0
        %1266 = vmatpush1.xpose.msra.mxu0 0.0
        %1267 = vmatprep.subr.mxu0 0.0
        %1268 = vmatpush1.xpose.msra.mxu0 0.0
        %1269 = vmatprep.subr.mxu0 0.0
        %1270 = vmatpush1.xpose.msra.mxu0 0.0
        %1271 = vmatprep.subr.mxu0 0.0
        %1272 = vmatpush1.xpose.msra.mxu0 0.0
        %1273 = vmatprep.subr.mxu0 0.0
        %1274 = vmatpush1.xpose.msra.mxu0 0.0
        %1275 = vmatprep.subr.mxu0 0.0
        %1276 = vmatpush1.xpose.msra.mxu0 0.0
        %1277 = vmatprep.subr.mxu0 0.0
        %1278 = vmatpush1.xpose.msra.mxu0 0.0
        %1279 = vmatprep.subr.mxu0 0.0
        %1280 = vmatpush1.xpose.msra.mxu0 0.0
        %1281 = vmatprep.subr.mxu0 0.0
        %1282 = vmatpush1.xpose.msra.mxu0 0.0
        %1283 = vmatprep.subr.mxu0 0.0
        %1284 = vmatpush1.xpose.msra.mxu0 0.0
        %1285 = vmatprep.subr.mxu0 0.0
        %1286 = vmatpush1.xpose.msra.mxu0 0.0
        %1287 = vmatprep.subr.mxu0 0.0
        %1288 = vmatpush1.xpose.msra.mxu0 0.0
        %1289 = vmatprep.subr.mxu0 0.0
        %1290 = vmatpush1.xpose.msra.mxu0 0.0
        %1291 = vmatprep.mubr.f32.mxu0 0.0
        %1292 = vmatmul.mubr.f32.gmra.mrb[0].mxu0 %v1219
        %v1293 = vpop.f32.mrb[0].mxu0
        %v1294 = vadd.f32 0.0, %v1293
        %v1295 = vpop.f32.mrb[0].mxu0
        %1296 = vmatprep.mubr.f32.mxu0 0.0
        %1297 = vmatmul.mubr.f32.gmra.mrb[0].mxu0 %v1221
        %v1298 = vpop.f32.mrb[0].mxu0
        %v1299 = vadd.f32 0.0, %v1298
        %v1300 = vpop.f32.mrb[0].mxu0
        %1301 = vdwg.mxu0
        %1304 = vrot.lane.b32.xlu0 %v1119, 120
        %v1305 = vpop.permute.xlu0 %1304
        %1306 = vrot.lane.b32.xlu0 %v1120, 120
        %v1307 = vpop.permute.xlu0 %1306
        %v1308 = vsel %vm1129, %v1119, 0
        %v1310 = vsel %vm1129, %v1120, 0
        %v1312 = vsel %vm1129, %v1305, 0
        %v1314 = vsel %vm1129, %v1307, 0
        %1316 = vmatprep.subr.mxu0 0.0
        %1317 = vmatpush1.xpose.msra.mxu0 %v1312
        %1318 = vmatprep.subr.mxu0 0.0
        %1319 = vmatpush1.xpose.msra.mxu0 %v1314
        %1320 = vmatprep.subr.mxu0 0.0
        %1321 = vmatpush1.xpose.msra.mxu0 0.0
        %1322 = vmatprep.subr.mxu0 0.0
        %1323 = vmatpush1.xpose.msra.mxu0 0.0
        %1324 = vmatprep.subr.mxu0 0.0
        %1325 = vmatpush1.xpose.msra.mxu0 0.0
        %1326 = vmatprep.subr.mxu0 0.0
        %1327 = vmatpush1.xpose.msra.mxu0 0.0
        %1328 = vmatprep.subr.mxu0 0.0
        %1329 = vmatpush1.xpose.msra.mxu0 0.0
        %1330 = vmatprep.subr.mxu0 0.0
        %1331 = vmatpush1.xpose.msra.mxu0 0.0
        %1332 = vmatprep.subr.mxu0 0.0
        %1333 = vmatpush1.xpose.msra.mxu0 0.0
        %1334 = vmatprep.subr.mxu0 0.0
        %1335 = vmatpush1.xpose.msra.mxu0 0.0
        %1336 = vmatprep.subr.mxu0 0.0
        %1337 = vmatpush1.xpose.msra.mxu0 0.0
        %1338 = vmatprep.subr.mxu0 0.0
        %1339 = vmatpush1.xpose.msra.mxu0 0.0
        %1340 = vmatprep.subr.mxu0 0.0
        %1341 = vmatpush1.xpose.msra.mxu0 0.0
        %1342 = vmatprep.subr.mxu0 0.0
        %1343 = vmatpush1.xpose.msra.mxu0 0.0
        %1344 = vmatprep.subr.mxu0 0.0
        %1345 = vmatpush1.xpose.msra.mxu0 0.0
        %1346 = vmatprep.subr.mxu0 0.0
        %1347 = vmatpush1.xpose.msra.mxu0 0.0
        %1348 = vmatprep.subr.mxu0 0.0
        %1349 = vmatpush1.xpose.msra.mxu0 0.0
        %1350 = vmatprep.subr.mxu0 0.0
        %1351 = vmatpush1.xpose.msra.mxu0 0.0
        %1352 = vmatprep.subr.mxu0 0.0
        %1353 = vmatpush1.xpose.msra.mxu0 0.0
        %1354 = vmatprep.subr.mxu0 0.0
        %1355 = vmatpush1.xpose.msra.mxu0 0.0
        %1356 = vmatprep.subr.mxu0 0.0
        %1357 = vmatpush1.xpose.msra.mxu0 0.0
        %1358 = vmatprep.subr.mxu0 0.0
        %1359 = vmatpush1.xpose.msra.mxu0 0.0
        %1360 = vmatprep.subr.mxu0 0.0
        %1361 = vmatpush1.xpose.msra.mxu0 0.0
        %1362 = vmatprep.subr.mxu0 0.0
        %1363 = vmatpush1.xpose.msra.mxu0 0.0
        %1364 = vmatprep.subr.mxu0 0.0
        %1365 = vmatpush1.xpose.msra.mxu0 0.0
        %1366 = vmatprep.subr.mxu0 0.0
        %1367 = vmatpush1.xpose.msra.mxu0 0.0
        %1368 = vmatprep.subr.mxu0 0.0
        %1369 = vmatpush1.xpose.msra.mxu0 0.0
        %1370 = vmatprep.subr.mxu0 0.0
        %1371 = vmatpush1.xpose.msra.mxu0 0.0
        %1372 = vmatprep.subr.mxu0 0.0
        %1373 = vmatpush1.xpose.msra.mxu0 0.0
        %1374 = vmatprep.subr.mxu0 0.0
        %1375 = vmatpush1.xpose.msra.mxu0 0.0
        %1376 = vmatprep.subr.mxu0 0.0
        %1377 = vmatpush1.xpose.msra.mxu0 0.0
        %1378 = vmatprep.subr.mxu0 0.0
        %1379 = vmatpush1.xpose.msra.mxu0 0.0
        %1380 = vmatprep.mubr.f32.mxu0 0.0
        %1381 = vmatmul.mubr.f32.gmra.mrb[0].mxu0 %v1308
        %v1382 = vpop.f32.mrb[0].mxu0
        %v1383 = vadd.f32 0.0, %v1382
        %v1384 = vpop.f32.mrb[0].mxu0
        %1385 = vmatprep.mubr.f32.mxu0 0.0
        %1386 = vmatmul.mubr.f32.gmra.mrb[0].mxu0 %v1310
        %v1387 = vpop.f32.mrb[0].mxu0
        %v1388 = vadd.f32 0.0, %v1387
        %v1389 = vpop.f32.mrb[0].mxu0
        %1390 = vdwg.mxu0
        %1393 = vrot.lane.b32.xlu0 %v1121, 120
        %v1394 = vpop.permute.xlu0 %1393
        %1395 = vrot.lane.b32.xlu0 %v1122, 120
        %v1396 = vpop.permute.xlu0 %1395
        %v1397 = vsel %vm1129, %v1121, 0
        %v1399 = vsel %vm1129, %v1122, 0
        %v1401 = vsel %vm1129, %v1394, 0
        %v1403 = vsel %vm1129, %v1396, 0
        %1405 = vmatprep.subr.mxu0 0.0
        %1406 = vmatpush1.xpose.msra.mxu0 %v1401
        %1407 = vmatprep.subr.mxu0 0.0
        %1408 = vmatpush1.xpose.msra.mxu0 %v1403
        %1409 = vmatprep.subr.mxu0 0.0
        %1410 = vmatpush1.xpose.msra.mxu0 0.0
        %1411 = vmatprep.subr.mxu0 0.0
        %1412 = vmatpush1.xpose.msra.mxu0 0.0
        %1413 = vmatprep.subr.mxu0 0.0
        %1414 = vmatpush1.xpose.msra.mxu0 0.0
        %1415 = vmatprep.subr.mxu0 0.0
        %1416 = vmatpush1.xpose.msra.mxu0 0.0
        %1417 = vmatprep.subr.mxu0 0.0
        %1418 = vmatpush1.xpose.msra.mxu0 0.0
        %1419 = vmatprep.subr.mxu0 0.0
        %1420 = vmatpush1.xpose.msra.mxu0 0.0
        %1421 = vmatprep.subr.mxu0 0.0
        %1422 = vmatpush1.xpose.msra.mxu0 0.0
        %1423 = vmatprep.subr.mxu0 0.0
        %1424 = vmatpush1.xpose.msra.mxu0 0.0
        %1425 = vmatprep.subr.mxu0 0.0
        %1426 = vmatpush1.xpose.msra.mxu0 0.0
        %1427 = vmatprep.subr.mxu0 0.0
        %1428 = vmatpush1.xpose.msra.mxu0 0.0
        %1429 = vmatprep.subr.mxu0 0.0
        %1430 = vmatpush1.xpose.msra.mxu0 0.0
        %1431 = vmatprep.subr.mxu0 0.0
        %1432 = vmatpush1.xpose.msra.mxu0 0.0
        %1433 = vmatprep.subr.mxu0 0.0
        %1434 = vmatpush1.xpose.msra.mxu0 0.0
        %1435 = vmatprep.subr.mxu0 0.0
        %1436 = vmatpush1.xpose.msra.mxu0 0.0
        %1437 = vmatprep.subr.mxu0 0.0
        %1438 = vmatpush1.xpose.msra.mxu0 0.0
        %1439 = vmatprep.subr.mxu0 0.0
        %1440 = vmatpush1.xpose.msra.mxu0 0.0
        %1441 = vmatprep.subr.mxu0 0.0
        %1442 = vmatpush1.xpose.msra.mxu0 0.0
        %1443 = vmatprep.subr.mxu0 0.0
        %1444 = vmatpush1.xpose.msra.mxu0 0.0
        %1445 = vmatprep.subr.mxu0 0.0
        %1446 = vmatpush1.xpose.msra.mxu0 0.0
        %1447 = vmatprep.subr.mxu0 0.0
        %1448 = vmatpush1.xpose.msra.mxu0 0.0
        %1449 = vmatprep.subr.mxu0 0.0
        %1450 = vmatpush1.xpose.msra.mxu0 0.0
        %1451 = vmatprep.subr.mxu0 0.0
        %1452 = vmatpush1.xpose.msra.mxu0 0.0
        %1453 = vmatprep.subr.mxu0 0.0
        %1454 = vmatpush1.xpose.msra.mxu0 0.0
        %1455 = vmatprep.subr.mxu0 0.0
        %1456 = vmatpush1.xpose.msra.mxu0 0.0
        %1457 = vmatprep.subr.mxu0 0.0
        %1458 = vmatpush1.xpose.msra.mxu0 0.0
        %1459 = vmatprep.subr.mxu0 0.0
        %1460 = vmatpush1.xpose.msra.mxu0 0.0
        %1461 = vmatprep.subr.mxu0 0.0
        %1462 = vmatpush1.xpose.msra.mxu0 0.0
        %1463 = vmatprep.subr.mxu0 0.0
        %1464 = vmatpush1.xpose.msra.mxu0 0.0
        %1465 = vmatprep.subr.mxu0 0.0
        %1466 = vmatpush1.xpose.msra.mxu0 0.0
        %1467 = vmatprep.subr.mxu0 0.0
        %1468 = vmatpush1.xpose.msra.mxu0 0.0
        %1469 = vmatprep.mubr.f32.mxu0 0.0
        %1470 = vmatmul.mubr.f32.gmra.mrb[0].mxu0 %v1397
        %v1471 = vpop.f32.mrb[0].mxu0
        %v1472 = vadd.f32 0.0, %v1471
        %v1473 = vpop.f32.mrb[0].mxu0
        %1474 = vmatprep.mubr.f32.mxu0 0.0
        %1475 = vmatmul.mubr.f32.gmra.mrb[0].mxu0 %v1399
        %v1476 = vpop.f32.mrb[0].mxu0
        %v1477 = vadd.f32 0.0, %v1476
        %v1478 = vpop.f32.mrb[0].mxu0
        %1479 = vdwg.mxu0
        %vm1480 = vcmask 130048
        %v1481 = vsel %vm1480, %v1205, inf
        %1482 = vmin.xlane.f32.xlu0 %v1481
        %v1483 = vpop.xlane.xlu0 %1482
        %v1484 = vsel %vm1480, %v1210, inf
        %1485 = vmin.xlane.f32.xlu0 %v1484
        %v1486 = vpop.xlane.xlu0 %1485
        %v1487 = vsel %vm1480, %v1294, inf
        %1488 = vmin.xlane.f32.xlu0 %v1487
        %v1489 = vpop.xlane.xlu0 %1488
        %v1490 = vsel %vm1480, %v1299, inf
        %1491 = vmin.xlane.f32.xlu0 %v1490
        %v1492 = vpop.xlane.xlu0 %1491
        %v1493 = vsel %vm1480, %v1383, inf
        %1494 = vmin.xlane.f32.xlu0 %v1493
        %v1495 = vpop.xlane.xlu0 %1494
        %v1496 = vsel %vm1480, %v1388, inf
        %1497 = vmin.xlane.f32.xlu0 %v1496
        %v1498 = vpop.xlane.xlu0 %1497
        %v1499 = vsel %vm1480, %v1472, inf
        %1500 = vmin.xlane.f32.xlu0 %v1499
        %v1501 = vpop.xlane.xlu0 %1500
        %v1502 = vsel %vm1480, %v1477, inf
        %1503 = vmin.xlane.f32.xlu0 %v1502
        %v1504 = vpop.xlane.xlu0 %1503
        %vm1505 = vcmp.le.f32.partialorder %v1205, %v1483
        %vm1506 = vcmp.le.f32.partialorder %v1210, %v1486
        %vm1507 = vcmp.le.f32.partialorder %v1294, %v1489
        %vm1508 = vcmp.le.f32.partialorder %v1299, %v1492
        %vm1509 = vcmp.le.f32.partialorder %v1383, %v1495
        %vm1510 = vcmp.le.f32.partialorder %v1388, %v1498
        %vm1511 = vcmp.le.f32.partialorder %v1472, %v1501
        %vm1512 = vcmp.le.f32.partialorder %v1477, %v1504
        %v1513 = vsel %vm1505, inf, %v1205
        %v1514 = vsel %vm1506, inf, %v1210
        %v1515 = vsel %vm1507, inf, %v1294
        %v1516 = vsel %vm1508, inf, %v1299
        %v1517 = vsel %vm1509, inf, %v1383
        %v1518 = vsel %vm1510, inf, %v1388
        %v1519 = vsel %vm1511, inf, %v1472
        %v1520 = vsel %vm1512, inf, %v1477
        %v1521 = vsel %vm1480, %v1513, inf
        %1522 = vmin.xlane.f32.xlu0 %v1521
        %v1523 = vpop.xlane.xlu0 %1522
        %v1524 = vsel %vm1480, %v1514, inf
        %1525 = vmin.xlane.f32.xlu0 %v1524
        %v1526 = vpop.xlane.xlu0 %1525
        %v1527 = vsel %vm1480, %v1515, inf
        %1528 = vmin.xlane.f32.xlu0 %v1527
        %v1529 = vpop.xlane.xlu0 %1528
        %v1530 = vsel %vm1480, %v1516, inf
        %1531 = vmin.xlane.f32.xlu0 %v1530
        %v1532 = vpop.xlane.xlu0 %1531
        %v1533 = vsel %vm1480, %v1517, inf
        %1534 = vmin.xlane.f32.xlu0 %v1533
        %v1535 = vpop.xlane.xlu0 %1534
        %v1536 = vsel %vm1480, %v1518, inf
        %1537 = vmin.xlane.f32.xlu0 %v1536
        %v1538 = vpop.xlane.xlu0 %1537
        %v1539 = vsel %vm1480, %v1519, inf
        %1540 = vmin.xlane.f32.xlu0 %v1539
        %v1541 = vpop.xlane.xlu0 %1540
        %v1542 = vsel %vm1480, %v1520, inf
        %1543 = vmin.xlane.f32.xlu0 %v1542
        %v1544 = vpop.xlane.xlu0 %1543
        %vm1545 = vcmp.le.f32.partialorder %v1513, %v1523
        %vm1546 = vcmp.le.f32.partialorder %v1514, %v1526
        %vm1547 = vcmp.le.f32.partialorder %v1515, %v1529
        %vm1548 = vcmp.le.f32.partialorder %v1516, %v1532
        %vm1549 = vcmp.le.f32.partialorder %v1517, %v1535
        %vm1550 = vcmp.le.f32.partialorder %v1518, %v1538
        %vm1551 = vcmp.le.f32.partialorder %v1519, %v1541
        %vm1552 = vcmp.le.f32.partialorder %v1520, %v1544
        %v1553 = vsel %vm1545, inf, %v1513
        %v1554 = vsel %vm1546, inf, %v1514
        %v1555 = vsel %vm1547, inf, %v1515
        %v1556 = vsel %vm1548, inf, %v1516
        %v1557 = vsel %vm1549, inf, %v1517
        %v1558 = vsel %vm1550, inf, %v1518
        %v1559 = vsel %vm1551, inf, %v1519
        %v1560 = vsel %vm1552, inf, %v1520
        %v1561 = vsel %vm1480, %v1553, inf
        %1562 = vmin.xlane.f32.xlu0 %v1561
        %v1563 = vpop.xlane.xlu0 %1562
        %v1564 = vsel %vm1480, %v1554, inf
        %1565 = vmin.xlane.f32.xlu0 %v1564
        %v1566 = vpop.xlane.xlu0 %1565
        %v1567 = vsel %vm1480, %v1555, inf
        %1568 = vmin.xlane.f32.xlu0 %v1567
        %v1569 = vpop.xlane.xlu0 %1568
        %v1570 = vsel %vm1480, %v1556, inf
        %1571 = vmin.xlane.f32.xlu0 %v1570
        %v1572 = vpop.xlane.xlu0 %1571
        %v1573 = vsel %vm1480, %v1557, inf
        %1574 = vmin.xlane.f32.xlu0 %v1573
        %v1575 = vpop.xlane.xlu0 %1574
        %v1576 = vsel %vm1480, %v1558, inf
        %1577 = vmin.xlane.f32.xlu0 %v1576
        %v1578 = vpop.xlane.xlu0 %1577
        %v1579 = vsel %vm1480, %v1559, inf
        %1580 = vmin.xlane.f32.xlu0 %v1579
        %v1581 = vpop.xlane.xlu0 %1580
        %v1582 = vsel %vm1480, %v1560, inf
        %1583 = vmin.xlane.f32.xlu0 %v1582
        %v1584 = vpop.xlane.xlu0 %1583
        %vm1585 = vcmp.le.f32.partialorder %v1553, %v1563
        %vm1586 = vcmp.le.f32.partialorder %v1554, %v1566
        %vm1587 = vcmp.le.f32.partialorder %v1555, %v1569
        %vm1588 = vcmp.le.f32.partialorder %v1556, %v1572
        %vm1589 = vcmp.le.f32.partialorder %v1557, %v1575
        %vm1590 = vcmp.le.f32.partialorder %v1558, %v1578
        %vm1591 = vcmp.le.f32.partialorder %v1559, %v1581
        %vm1592 = vcmp.le.f32.partialorder %v1560, %v1584
        %v1593 = vsel %vm1585, inf, %v1553
        %v1594 = vsel %vm1586, inf, %v1554
        %v1595 = vsel %vm1587, inf, %v1555
        %v1596 = vsel %vm1588, inf, %v1556
        %v1597 = vsel %vm1589, inf, %v1557
        %v1598 = vsel %vm1590, inf, %v1558
        %v1599 = vsel %vm1591, inf, %v1559
        %v1600 = vsel %vm1592, inf, %v1560
        %v1601 = vsel %vm1480, %v1593, inf
        %1602 = vmin.xlane.f32.xlu0 %v1601
        %v1603 = vpop.xlane.xlu0 %1602
        %v1604 = vsel %vm1480, %v1594, inf
        %1605 = vmin.xlane.f32.xlu0 %v1604
        %v1606 = vpop.xlane.xlu0 %1605
        %v1607 = vsel %vm1480, %v1595, inf
        %1608 = vmin.xlane.f32.xlu0 %v1607
        %v1609 = vpop.xlane.xlu0 %1608
        %v1610 = vsel %vm1480, %v1596, inf
        %1611 = vmin.xlane.f32.xlu0 %v1610
        %v1612 = vpop.xlane.xlu0 %1611
        %v1613 = vsel %vm1480, %v1597, inf
        %1614 = vmin.xlane.f32.xlu0 %v1613
        %v1615 = vpop.xlane.xlu0 %1614
        %v1616 = vsel %vm1480, %v1598, inf
        %1617 = vmin.xlane.f32.xlu0 %v1616
        %v1618 = vpop.xlane.xlu0 %1617
        %v1619 = vsel %vm1480, %v1599, inf
        %1620 = vmin.xlane.f32.xlu0 %v1619
        %v1621 = vpop.xlane.xlu0 %1620
        %v1622 = vsel %vm1480, %v1600, inf
        %1623 = vmin.xlane.f32.xlu0 %v1622
        %v1624 = vpop.xlane.xlu0 %1623
        %vm1625 = vcmp.le.f32.partialorder %v1593, %v1603
        %vm1626 = vcmp.le.f32.partialorder %v1594, %v1606
        %vm1627 = vcmp.le.f32.partialorder %v1595, %v1609
        %vm1628 = vcmp.le.f32.partialorder %v1596, %v1612
        %vm1629 = vcmp.le.f32.partialorder %v1597, %v1615
        %vm1630 = vcmp.le.f32.partialorder %v1598, %v1618
        %vm1631 = vcmp.le.f32.partialorder %v1599, %v1621
        %vm1632 = vcmp.le.f32.partialorder %v1600, %v1624
        %v1633 = vsel %vm1625, inf, %v1593
        %v1634 = vsel %vm1626, inf, %v1594
        %v1635 = vsel %vm1627, inf, %v1595
        %v1636 = vsel %vm1628, inf, %v1596
        %v1637 = vsel %vm1629, inf, %v1597
        %v1638 = vsel %vm1630, inf, %v1598
        %v1639 = vsel %vm1631, inf, %v1599
        %v1640 = vsel %vm1632, inf, %v1600
        %v1641 = vsel %vm1480, %v1633, inf
        %1642 = vmin.xlane.f32.xlu0 %v1641
        %v1643 = vpop.xlane.xlu0 %1642
        %v1644 = vsel %vm1480, %v1634, inf
        %1645 = vmin.xlane.f32.xlu0 %v1644
        %v1646 = vpop.xlane.xlu0 %1645
        %v1647 = vsel %vm1480, %v1635, inf
        %1648 = vmin.xlane.f32.xlu0 %v1647
        %v1649 = vpop.xlane.xlu0 %1648
        %v1650 = vsel %vm1480, %v1636, inf
        %1651 = vmin.xlane.f32.xlu0 %v1650
        %v1652 = vpop.xlane.xlu0 %1651
        %v1653 = vsel %vm1480, %v1637, inf
        %1654 = vmin.xlane.f32.xlu0 %v1653
        %v1655 = vpop.xlane.xlu0 %1654
        %v1656 = vsel %vm1480, %v1638, inf
        %1657 = vmin.xlane.f32.xlu0 %v1656
        %v1658 = vpop.xlane.xlu0 %1657
        %v1659 = vsel %vm1480, %v1639, inf
        %1660 = vmin.xlane.f32.xlu0 %v1659
        %v1661 = vpop.xlane.xlu0 %1660
        %v1662 = vsel %vm1480, %v1640, inf
        %1663 = vmin.xlane.f32.xlu0 %v1662
        %v1664 = vpop.xlane.xlu0 %1663
        %vm1665 = vcmp.le.f32.partialorder %v1633, %v1643
        %vm1666 = vcmp.le.f32.partialorder %v1634, %v1646
        %vm1667 = vcmp.le.f32.partialorder %v1635, %v1649
        %vm1668 = vcmp.le.f32.partialorder %v1636, %v1652
        %vm1669 = vcmp.le.f32.partialorder %v1637, %v1655
        %vm1670 = vcmp.le.f32.partialorder %v1638, %v1658
        %vm1671 = vcmp.le.f32.partialorder %v1639, %v1661
        %vm1672 = vcmp.le.f32.partialorder %v1640, %v1664
        %v1673 = vsel %vm1665, inf, %v1633
        %v1674 = vsel %vm1666, inf, %v1634
        %v1675 = vsel %vm1667, inf, %v1635
        %v1676 = vsel %vm1668, inf, %v1636
        %v1677 = vsel %vm1669, inf, %v1637
        %v1678 = vsel %vm1670, inf, %v1638
        %v1679 = vsel %vm1671, inf, %v1639
        %v1680 = vsel %vm1672, inf, %v1640
        %v1681 = vsel %vm1480, %v1673, inf
        %1682 = vmin.xlane.f32.xlu0 %v1681
        %v1683 = vpop.xlane.xlu0 %1682
        %v1684 = vsel %vm1480, %v1674, inf
        %1685 = vmin.xlane.f32.xlu0 %v1684
        %v1686 = vpop.xlane.xlu0 %1685
        %v1687 = vsel %vm1480, %v1675, inf
        %1688 = vmin.xlane.f32.xlu0 %v1687
        %v1689 = vpop.xlane.xlu0 %1688
        %v1690 = vsel %vm1480, %v1676, inf
        %1691 = vmin.xlane.f32.xlu0 %v1690
        %v1692 = vpop.xlane.xlu0 %1691
        %v1693 = vsel %vm1480, %v1677, inf
        %1694 = vmin.xlane.f32.xlu0 %v1693
        %v1695 = vpop.xlane.xlu0 %1694
        %v1696 = vsel %vm1480, %v1678, inf
        %1697 = vmin.xlane.f32.xlu0 %v1696
        %v1698 = vpop.xlane.xlu0 %1697
        %v1699 = vsel %vm1480, %v1679, inf
        %1700 = vmin.xlane.f32.xlu0 %v1699
        %v1701 = vpop.xlane.xlu0 %1700
        %v1702 = vsel %vm1480, %v1680, inf
        %1703 = vmin.xlane.f32.xlu0 %v1702
        %v1704 = vpop.xlane.xlu0 %1703
        %vm1705 = vcmp.le.f32.partialorder %v1673, %v1683
        %vm1706 = vcmp.le.f32.partialorder %v1674, %v1686
        %vm1707 = vcmp.le.f32.partialorder %v1675, %v1689
        %vm1708 = vcmp.le.f32.partialorder %v1676, %v1692
        %vm1709 = vcmp.le.f32.partialorder %v1677, %v1695
        %vm1710 = vcmp.le.f32.partialorder %v1678, %v1698
        %vm1711 = vcmp.le.f32.partialorder %v1679, %v1701
        %vm1712 = vcmp.le.f32.partialorder %v1680, %v1704
        %v1713 = vsel %vm1705, inf, %v1673
        %v1714 = vsel %vm1706, inf, %v1674
        %v1715 = vsel %vm1707, inf, %v1675
        %v1716 = vsel %vm1708, inf, %v1676
        %v1717 = vsel %vm1709, inf, %v1677
        %v1718 = vsel %vm1710, inf, %v1678
        %v1719 = vsel %vm1711, inf, %v1679
        %v1720 = vsel %vm1712, inf, %v1680
        %v1721 = vsel %vm1480, %v1713, inf
        %1722 = vmin.xlane.f32.xlu0 %v1721
        %v1723 = vpop.xlane.xlu0 %1722
        %v1724 = vsel %vm1480, %v1714, inf
        %1725 = vmin.xlane.f32.xlu0 %v1724
        %v1726 = vpop.xlane.xlu0 %1725
        %v1727 = vsel %vm1480, %v1715, inf
        %1728 = vmin.xlane.f32.xlu0 %v1727
        %v1729 = vpop.xlane.xlu0 %1728
        %v1730 = vsel %vm1480, %v1716, inf
        %1731 = vmin.xlane.f32.xlu0 %v1730
        %v1732 = vpop.xlane.xlu0 %1731
        %v1733 = vsel %vm1480, %v1717, inf
        %1734 = vmin.xlane.f32.xlu0 %v1733
        %v1735 = vpop.xlane.xlu0 %1734
        %v1736 = vsel %vm1480, %v1718, inf
        %1737 = vmin.xlane.f32.xlu0 %v1736
        %v1738 = vpop.xlane.xlu0 %1737
        %v1739 = vsel %vm1480, %v1719, inf
        %1740 = vmin.xlane.f32.xlu0 %v1739
        %v1741 = vpop.xlane.xlu0 %1740
        %v1742 = vsel %vm1480, %v1720, inf
        %1743 = vmin.xlane.f32.xlu0 %v1742
        %v1744 = vpop.xlane.xlu0 %1743
        %vm1745 = vcmp.ge.f32.partialorder %v1205, %v1723
        %vm1746 = vcmp.ge.f32.partialorder %v1210, %v1726
        %vm1747 = vcmp.ge.f32.partialorder %v1294, %v1729
        %vm1748 = vcmp.ge.f32.partialorder %v1299, %v1732
        %vm1749 = vcmp.ge.f32.partialorder %v1383, %v1735
        %vm1750 = vcmp.ge.f32.partialorder %v1388, %v1738
        %vm1751 = vcmp.ge.f32.partialorder %v1472, %v1741
        %vm1752 = vcmp.ge.f32.partialorder %v1477, %v1744
        %v1753 = vsel %vm1745, %v1205, -inf
        %v1754 = vsel %vm1746, %v1210, -inf
        %v1755 = vsel %vm1747, %v1294, -inf
        %v1756 = vsel %vm1748, %v1299, -inf
        %v1757 = vsel %vm1749, %v1383, -inf
        %v1758 = vsel %vm1750, %v1388, -inf
        %v1759 = vsel %vm1751, %v1472, -inf
        %v1760 = vsel %vm1752, %v1477, -inf
        %v1761 = vsel %vm1480, %v1753, -inf
        %1762 = vmax.xlane.f32.xlu0 %v1761
        %v1763 = vpop.xlane.xlu0 %1762
        %v1764 = vsel %vm1480, %v1754, -inf
        %1765 = vmax.xlane.f32.xlu0 %v1764
        %v1766 = vpop.xlane.xlu0 %1765
        %v1767 = vsel %vm1480, %v1755, -inf
        %1768 = vmax.xlane.f32.xlu0 %v1767
        %v1769 = vpop.xlane.xlu0 %1768
        %v1770 = vsel %vm1480, %v1756, -inf
        %1771 = vmax.xlane.f32.xlu0 %v1770
        %v1772 = vpop.xlane.xlu0 %1771
        %v1773 = vsel %vm1480, %v1757, -inf
        %1774 = vmax.xlane.f32.xlu0 %v1773
        %v1775 = vpop.xlane.xlu0 %1774
        %v1776 = vsel %vm1480, %v1758, -inf
        %1777 = vmax.xlane.f32.xlu0 %v1776
        %v1778 = vpop.xlane.xlu0 %1777
        %v1779 = vsel %vm1480, %v1759, -inf
        %1780 = vmax.xlane.f32.xlu0 %v1779
        %v1781 = vpop.xlane.xlu0 %1780
        %v1782 = vsel %vm1480, %v1760, -inf
        %1783 = vmax.xlane.f32.xlu0 %v1782
        %v1784 = vpop.xlane.xlu0 %1783
        %v1785 = vsub.f32 %v1753, %v1763
        %v1786 = vsub.f32 %v1754, %v1766
        %v1787 = vsub.f32 %v1755, %v1769
        %v1788 = vsub.f32 %v1756, %v1772
        %v1789 = vsub.f32 %v1757, %v1775
        %v1790 = vsub.f32 %v1758, %v1778
        %v1791 = vsub.f32 %v1759, %v1781
        %v1792 = vsub.f32 %v1760, %v1784
        %v1793 = vmul.f32 %v1785, 1.442695
        %v1794 = vpow.pop %v1793
        %v1795 = vmul.f32 %v1786, 1.442695
        %v1796 = vpow.pop %v1795
        %v1797 = vmul.f32 %v1787, 1.442695
        %v1798 = vpow.pop %v1797
        %v1799 = vmul.f32 %v1788, 1.442695
        %v1800 = vpow.pop %v1799
        %v1801 = vmul.f32 %v1789, 1.442695
        %v1802 = vpow.pop %v1801
        %v1803 = vmul.f32 %v1790, 1.442695
        %v1804 = vpow.pop %v1803
        %v1805 = vmul.f32 %v1791, 1.442695
        %v1806 = vpow.pop %v1805
        %v1807 = vmul.f32 %v1792, 1.442695
        %v1808 = vpow.pop %v1807
        %v1809 = vsel %vm1480, %v1794, 0.0
        %1810 = vadd.xlane.f32.xlu0 %v1809
        %v1811 = vpop.xlane.xlu0 %1810
        %v1812 = vsel %vm1480, %v1796, 0.0
        %1813 = vadd.xlane.f32.xlu0 %v1812
        %v1814 = vpop.xlane.xlu0 %1813
        %v1815 = vsel %vm1480, %v1798, 0.0
        %1816 = vadd.xlane.f32.xlu0 %v1815
        %v1817 = vpop.xlane.xlu0 %1816
        %v1818 = vsel %vm1480, %v1800, 0.0
        %1819 = vadd.xlane.f32.xlu0 %v1818
        %v1820 = vpop.xlane.xlu0 %1819
        %v1821 = vsel %vm1480, %v1802, 0.0
        %1822 = vadd.xlane.f32.xlu0 %v1821
        %v1823 = vpop.xlane.xlu0 %1822
        %v1824 = vsel %vm1480, %v1804, 0.0
        %1825 = vadd.xlane.f32.xlu0 %v1824
        %v1826 = vpop.xlane.xlu0 %1825
        %v1827 = vsel %vm1480, %v1806, 0.0
        %1828 = vadd.xlane.f32.xlu0 %v1827
        %v1829 = vpop.xlane.xlu0 %1828
        %v1830 = vsel %vm1480, %v1808, 0.0
        %1831 = vadd.xlane.f32.xlu0 %v1830
        %v1832 = vpop.xlane.xlu0 %1831
        %v1833 = vrcp.pop %v1811
        %v1834 = vrcp.pop %v1814
        %v1835 = vrcp.pop %v1817
        %v1836 = vrcp.pop %v1820
        %v1837 = vrcp.pop %v1823
        %v1838 = vrcp.pop %v1826
        %v1839 = vrcp.pop %v1829
        %v1840 = vrcp.pop %v1832
        %v1841 = vmul.f32 %v1833, 0.5
        %v1842 = vmul.f32 %v1834, 0.5
        %v1843 = vmul.f32 %v1835, 0.5
        %v1844 = vmul.f32 %v1836, 0.5
        %v1845 = vmul.f32 %v1837, 0.5
        %v1846 = vmul.f32 %v1838, 0.5
        %v1847 = vmul.f32 %v1839, 0.5
        %v1848 = vmul.f32 %v1840, 0.5
        %v1849 = vlaneseq
        %v1850 = vshrl.u32 %v1849, 7
        %v1851 = vadd.s32 %v1850, 8
        %v1852 = vlaneseq
        %v1853 = vand.u32 %v1852, 127
        %v1854 = vsub.s32 %v1850, %v1853
        %v1855 = vsub.s32 %v1851, %v1853
        %vm1856 = vcmp.lt.s32.totalorder %v1854, 0
        %v1857 = vsub.s32 0, %v1854
        %v1858 = vsel %vm1856, %v1857, %v1854
        %vm1859 = vcmp.lt.s32.totalorder %v1855, 0
        %v1860 = vsub.s32 0, %v1855
        %v1861 = vsel %vm1859, %v1860, %v1855
        %vm1862 = vcmp.le.s32.totalorder %v1858, 2
        %vm1863 = vcmp.le.s32.totalorder %v1861, 2
        %v1864 = vsel %vm1862, 0.5, 0.0
        %v1865 = vsel %vm1863, 0.5, 0.0
        %v1866 = vmul.f32 %v1794, %v1841
        %v1867 = vmul.f32 %v1796, %v1842
        %v1868 = vmul.f32 %v1798, %v1843
        %v1869 = vmul.f32 %v1800, %v1844
        %v1870 = vmul.f32 %v1802, %v1845
        %v1871 = vmul.f32 %v1804, %v1846
        %v1872 = vmul.f32 %v1806, %v1847
        %v1873 = vmul.f32 %v1808, %v1848
        %v1874 = vadd.f32 %v1866, %v1864
        %v1875 = vadd.f32 %v1867, %v1865
        %v1876 = vadd.f32 %v1868, %v1864
        %v1877 = vadd.f32 %v1869, %v1865
        %v1878 = vadd.f32 %v1870, %v1864
        %v1879 = vadd.f32 %v1871, %v1865
        %v1880 = vadd.f32 %v1872, %v1864
        %v1881 = vadd.f32 %v1873, %v1865
        %v1882 = vpack.c.bf16 %v1875, %v1874
        %v1883 = vpack.c.bf16 %v1877, %v1876
        %v1884 = vpack.c.bf16 %v1879, %v1878
        %v1885 = vpack.c.bf16 %v1881, %v1880
        %v1886 = vpack.c.bf16 %v1116, %v1115
        %v1887 = vpack.c.bf16 %v1118, %v1117
        %v1888 = vpack.c.bf16 %v1120, %v1119
        %v1889 = vpack.c.bf16 %v1122, %v1121
        %1891 = vrot.lane.b32.xlu0 %v1886, 112
        %v1892 = vpop.permute.xlu0 %1891
        %v1895 = vsel %vm1480, %v1882, 0
        %1897 = vmatprep.subr.bf16.mxu0 0
        %1898 = vmatpush1.bf16.msra.mxu0 %v1892
        %1899 = vmatprep.subr.bf16.mxu0 0
        %1900 = vmatpush1.bf16.msra.mxu0 0
        %1901 = vmatprep.subr.bf16.mxu0 0
        %1902 = vmatpush1.bf16.msra.mxu0 0
        %1903 = vmatprep.subr.bf16.mxu0 0
        %1904 = vmatpush1.bf16.msra.mxu0 0
        %1905 = vmatprep.subr.bf16.mxu0 0
        %1906 = vmatpush1.bf16.msra.mxu0 0
        %1907 = vmatprep.subr.bf16.mxu0 0
        %1908 = vmatpush1.bf16.msra.mxu0 0
        %1909 = vmatprep.subr.bf16.mxu0 0
        %1910 = vmatpush1.bf16.msra.mxu0 0
        %1911 = vmatprep.subr.bf16.mxu0 0
        %1912 = vmatpush1.bf16.msra.mxu0 0
        %1913 = vmatprep.subr.bf16.mxu0 0
        %1914 = vmatpush1.bf16.msra.mxu0 0
        %1915 = vmatprep.subr.bf16.mxu0 0
        %1916 = vmatpush1.bf16.msra.mxu0 0
        %1917 = vmatprep.subr.bf16.mxu0 0
        %1918 = vmatpush1.bf16.msra.mxu0 0
        %1919 = vmatprep.subr.bf16.mxu0 0
        %1920 = vmatpush1.bf16.msra.mxu0 0
        %1921 = vmatprep.subr.bf16.mxu0 0
        %1922 = vmatpush1.bf16.msra.mxu0 0
        %1923 = vmatprep.subr.bf16.mxu0 0
        %1924 = vmatpush1.bf16.msra.mxu0 0
        %1925 = vmatprep.subr.bf16.mxu0 0
        %1926 = vmatpush1.bf16.msra.mxu0 0
        %1927 = vmatprep.subr.bf16.mxu0 0
        %1928 = vmatpush1.bf16.msra.mxu0 0
        %1929 = vmatprep.mubr.bf16.mxu0 0
        %1930 = vmatmul.mubr.bf16.gmra.mrb[0].mxu0 %v1895
        %v1931 = vpop.f32.mrb[0].mxu0
        %v1932 = vadd.f32 0.0, %v1931
        %v1933 = vpop.f32.mrb[0].mxu0
        %v1934 = vpop.f32.mrb[0].mxu0
        %v1935 = vadd.f32 0.0, %v1934
        %v1936 = vpop.f32.mrb[0].mxu0
        %1937 = vdwg.mxu0
        %1939 = vrot.lane.b32.xlu0 %v1887, 112
        %v1940 = vpop.permute.xlu0 %1939
        %v1943 = vsel %vm1480, %v1883, 0
        %1945 = vmatprep.subr.bf16.mxu0 0
        %1946 = vmatpush1.bf16.msra.mxu0 %v1940
        %1947 = vmatprep.subr.bf16.mxu0 0
        %1948 = vmatpush1.bf16.msra.mxu0 0
        %1949 = vmatprep.subr.bf16.mxu0 0
        %1950 = vmatpush1.bf16.msra.mxu0 0
        %1951 = vmatprep.subr.bf16.mxu0 0
        %1952 = vmatpush1.bf16.msra.mxu0 0
        %1953 = vmatprep.subr.bf16.mxu0 0
        %1954 = vmatpush1.bf16.msra.mxu0 0
        %1955 = vmatprep.subr.bf16.mxu0 0
        %1956 = vmatpush1.bf16.msra.mxu0 0
        %1957 = vmatprep.subr.bf16.mxu0 0
        %1958 = vmatpush1.bf16.msra.mxu0 0
        %1959 = vmatprep.subr.bf16.mxu0 0
        %1960 = vmatpush1.bf16.msra.mxu0 0
        %1961 = vmatprep.subr.bf16.mxu0 0
        %1962 = vmatpush1.bf16.msra.mxu0 0
        %1963 = vmatprep.subr.bf16.mxu0 0
        %1964 = vmatpush1.bf16.msra.mxu0 0
        %1965 = vmatprep.subr.bf16.mxu0 0
        %1966 = vmatpush1.bf16.msra.mxu0 0
        %1967 = vmatprep.subr.bf16.mxu0 0
        %1968 = vmatpush1.bf16.msra.mxu0 0
        %1969 = vmatprep.subr.bf16.mxu0 0
        %1970 = vmatpush1.bf16.msra.mxu0 0
        %1971 = vmatprep.subr.bf16.mxu0 0
        %1972 = vmatpush1.bf16.msra.mxu0 0
        %1973 = vmatprep.subr.bf16.mxu0 0
        %1974 = vmatpush1.bf16.msra.mxu0 0
        %1975 = vmatprep.subr.bf16.mxu0 0
        %1976 = vmatpush1.bf16.msra.mxu0 0
        %1977 = vmatprep.mubr.bf16.mxu0 0
        %1978 = vmatmul.mubr.bf16.gmra.mrb[0].mxu0 %v1943
        %v1979 = vpop.f32.mrb[0].mxu0
        %v1980 = vadd.f32 0.0, %v1979
        %v1981 = vpop.f32.mrb[0].mxu0
        %v1982 = vpop.f32.mrb[0].mxu0
        %v1983 = vadd.f32 0.0, %v1982
        %v1984 = vpop.f32.mrb[0].mxu0
        %1985 = vdwg.mxu0
        %1987 = vrot.lane.b32.xlu0 %v1888, 112
        %v1988 = vpop.permute.xlu0 %1987
        %v1991 = vsel %vm1480, %v1884, 0
        %1993 = vmatprep.subr.bf16.mxu0 0
        %1994 = vmatpush1.bf16.msra.mxu0 %v1988
        %1995 = vmatprep.subr.bf16.mxu0 0
        %1996 = vmatpush1.bf16.msra.mxu0 0
        %1997 = vmatprep.subr.bf16.mxu0 0
        %1998 = vmatpush1.bf16.msra.mxu0 0
        %1999 = vmatprep.subr.bf16.mxu0 0
        %2000 = vmatpush1.bf16.msra.mxu0 0
        %2001 = vmatprep.subr.bf16.mxu0 0
        %2002 = vmatpush1.bf16.msra.mxu0 0
        %2003 = vmatprep.subr.bf16.mxu0 0
        %2004 = vmatpush1.bf16.msra.mxu0 0
        %2005 = vmatprep.subr.bf16.mxu0 0
        %2006 = vmatpush1.bf16.msra.mxu0 0
        %2007 = vmatprep.subr.bf16.mxu0 0
        %2008 = vmatpush1.bf16.msra.mxu0 0
        %2009 = vmatprep.subr.bf16.mxu0 0
        %2010 = vmatpush1.bf16.msra.mxu0 0
        %2011 = vmatprep.subr.bf16.mxu0 0
        %2012 = vmatpush1.bf16.msra.mxu0 0
        %2013 = vmatprep.subr.bf16.mxu0 0
        %2014 = vmatpush1.bf16.msra.mxu0 0
        %2015 = vmatprep.subr.bf16.mxu0 0
        %2016 = vmatpush1.bf16.msra.mxu0 0
        %2017 = vmatprep.subr.bf16.mxu0 0
        %2018 = vmatpush1.bf16.msra.mxu0 0
        %2019 = vmatprep.subr.bf16.mxu0 0
        %2020 = vmatpush1.bf16.msra.mxu0 0
        %2021 = vmatprep.subr.bf16.mxu0 0
        %2022 = vmatpush1.bf16.msra.mxu0 0
        %2023 = vmatprep.subr.bf16.mxu0 0
        %2024 = vmatpush1.bf16.msra.mxu0 0
        %2025 = vmatprep.mubr.bf16.mxu0 0
        %2026 = vmatmul.mubr.bf16.gmra.mrb[0].mxu0 %v1991
        %v2027 = vpop.f32.mrb[0].mxu0
        %v2028 = vadd.f32 0.0, %v2027
        %v2029 = vpop.f32.mrb[0].mxu0
        %v2030 = vpop.f32.mrb[0].mxu0
        %v2031 = vadd.f32 0.0, %v2030
        %v2032 = vpop.f32.mrb[0].mxu0
        %2033 = vdwg.mxu0
        %2035 = vrot.lane.b32.xlu0 %v1889, 112
        %v2036 = vpop.permute.xlu0 %2035
        %v2039 = vsel %vm1480, %v1885, 0
        %2041 = vmatprep.subr.bf16.mxu0 0
        %2042 = vmatpush1.bf16.msra.mxu0 %v2036
        %2043 = vmatprep.subr.bf16.mxu0 0
        %2044 = vmatpush1.bf16.msra.mxu0 0
        %2045 = vmatprep.subr.bf16.mxu0 0
        %2046 = vmatpush1.bf16.msra.mxu0 0
        %2047 = vmatprep.subr.bf16.mxu0 0
        %2048 = vmatpush1.bf16.msra.mxu0 0
        %2049 = vmatprep.subr.bf16.mxu0 0
        %2050 = vmatpush1.bf16.msra.mxu0 0
        %2051 = vmatprep.subr.bf16.mxu0 0
        %2052 = vmatpush1.bf16.msra.mxu0 0
        %2053 = vmatprep.subr.bf16.mxu0 0
        %2054 = vmatpush1.bf16.msra.mxu0 0
        %2055 = vmatprep.subr.bf16.mxu0 0
        %2056 = vmatpush1.bf16.msra.mxu0 0
        %2057 = vmatprep.subr.bf16.mxu0 0
        %2058 = vmatpush1.bf16.msra.mxu0 0
        %2059 = vmatprep.subr.bf16.mxu0 0
        %2060 = vmatpush1.bf16.msra.mxu0 0
        %2061 = vmatprep.subr.bf16.mxu0 0
        %2062 = vmatpush1.bf16.msra.mxu0 0
        %2063 = vmatprep.subr.bf16.mxu0 0
        %2064 = vmatpush1.bf16.msra.mxu0 0
        %2065 = vmatprep.subr.bf16.mxu0 0
        %2066 = vmatpush1.bf16.msra.mxu0 0
        %2067 = vmatprep.subr.bf16.mxu0 0
        %2068 = vmatpush1.bf16.msra.mxu0 0
        %2069 = vmatprep.subr.bf16.mxu0 0
        %2070 = vmatpush1.bf16.msra.mxu0 0
        %2071 = vmatprep.subr.bf16.mxu0 0
        %2072 = vmatpush1.bf16.msra.mxu0 0
        %2073 = vmatprep.mubr.bf16.mxu0 0
        %2074 = vmatmul.mubr.bf16.gmra.mrb[0].mxu0 %v2039
        %v2075 = vpop.f32.mrb[0].mxu0
        %v2076 = vadd.f32 0.0, %v2075
        %v2077 = vpop.f32.mrb[0].mxu0
        %v2078 = vpop.f32.mrb[0].mxu0
        %v2079 = vadd.f32 0.0, %v2078
        %v2080 = vpop.f32.mrb[0].mxu0
        %2081 = vdwg.mxu0
        %v2082 = vpack.c.bf16 %v1935, %v1932
        %v2083 = vpack.c.bf16 %v1983, %v1980
        %v2084 = vpack.c.bf16 %v2031, %v2028
        %v2085 = vpack.c.bf16 %v2079, %v2076
        %v2086 = vld [vmem:[%s5] sm:$0xf]
        %v2087 = vld [vmem:[%s5 + $0x4] sm:$0xf]
        %v2088 = vld [vmem:[%s5 + $0x8] sm:$0xf]
        %v2089 = vld [vmem:[%s5 + $0xc] sm:$0xf]
        %v2091 = vsel %vm1129, %v2082, 0
        %v2094 = vsel %vm711, %v2086, 0
        %2096 = vmatprep.subr.bf16.mxu0 0
        %2097 = vmatpush1.bf16.msra.mxu0 %v2094
        %2098 = vmatprep.subr.bf16.mxu0 0
        %2099 = vmatpush1.bf16.msra.mxu0 0
        %2100 = vmatprep.subr.bf16.mxu0 0
        %2101 = vmatpush1.bf16.msra.mxu0 0
        %2102 = vmatprep.subr.bf16.mxu0 0
        %2103 = vmatpush1.bf16.msra.mxu0 0
        %2104 = vmatprep.subr.bf16.mxu0 0
        %2105 = vmatpush1.bf16.msra.mxu0 0
        %2106 = vmatprep.subr.bf16.mxu0 0
        %2107 = vmatpush1.bf16.msra.mxu0 0
        %2108 = vmatprep.subr.bf16.mxu0 0
        %2109 = vmatpush1.bf16.msra.mxu0 0
        %2110 = vmatprep.subr.bf16.mxu0 0
        %2111 = vmatpush1.bf16.msra.mxu0 0
        %2112 = vmatprep.subr.bf16.mxu0 0
        %2113 = vmatpush1.bf16.msra.mxu0 0
        %2114 = vmatprep.subr.bf16.mxu0 0
        %2115 = vmatpush1.bf16.msra.mxu0 0
        %2116 = vmatprep.subr.bf16.mxu0 0
        %2117 = vmatpush1.bf16.msra.mxu0 0
        %2118 = vmatprep.subr.bf16.mxu0 0
        %2119 = vmatpush1.bf16.msra.mxu0 0
        %2120 = vmatprep.subr.bf16.mxu0 0
        %2121 = vmatpush1.bf16.msra.mxu0 0
        %2122 = vmatprep.subr.bf16.mxu0 0
        %2123 = vmatpush1.bf16.msra.mxu0 0
        %2124 = vmatprep.subr.bf16.mxu0 0
        %2125 = vmatpush1.bf16.msra.mxu0 0
        %2126 = vmatprep.subr.bf16.mxu0 0
        %2127 = vmatpush1.bf16.msra.mxu0 0
        %2128 = vmatprep.mubr.bf16.mxu0 0
        %2129 = vmatmul.mubr.bf16.gmra.mrb[0].mxu0 %v2091
        %v2130 = vpop.f32.mrb[0].mxu0
        %v2131 = vadd.f32 0.0, %v2130
        %v2132 = vpop.f32.mrb[0].mxu0
        %v2133 = vpop.f32.mrb[0].mxu0
        %v2134 = vadd.f32 0.0, %v2133
        %v2135 = vpop.f32.mrb[0].mxu0
        %2136 = vdwg.mxu0
        %v2138 = vsel %vm1129, %v2083, 0
        %v2141 = vsel %vm711, %v2087, 0
        %2143 = vmatprep.subr.bf16.mxu0 0
        %2144 = vmatpush1.bf16.msra.mxu0 %v2141
        %2145 = vmatprep.subr.bf16.mxu0 0
        %2146 = vmatpush1.bf16.msra.mxu0 0
        %2147 = vmatprep.subr.bf16.mxu0 0
        %2148 = vmatpush1.bf16.msra.mxu0 0
        %2149 = vmatprep.subr.bf16.mxu0 0
        %2150 = vmatpush1.bf16.msra.mxu0 0
        %2151 = vmatprep.subr.bf16.mxu0 0
        %2152 = vmatpush1.bf16.msra.mxu0 0
        %2153 = vmatprep.subr.bf16.mxu0 0
        %2154 = vmatpush1.bf16.msra.mxu0 0
        %2155 = vmatprep.subr.bf16.mxu0 0
        %2156 = vmatpush1.bf16.msra.mxu0 0
        %2157 = vmatprep.subr.bf16.mxu0 0
        %2158 = vmatpush1.bf16.msra.mxu0 0
        %2159 = vmatprep.subr.bf16.mxu0 0
        %2160 = vmatpush1.bf16.msra.mxu0 0
        %2161 = vmatprep.subr.bf16.mxu0 0
        %2162 = vmatpush1.bf16.msra.mxu0 0
        %2163 = vmatprep.subr.bf16.mxu0 0
        %2164 = vmatpush1.bf16.msra.mxu0 0
        %2165 = vmatprep.subr.bf16.mxu0 0
        %2166 = vmatpush1.bf16.msra.mxu0 0
        %2167 = vmatprep.subr.bf16.mxu0 0
        %2168 = vmatpush1.bf16.msra.mxu0 0
        %2169 = vmatprep.subr.bf16.mxu0 0
        %2170 = vmatpush1.bf16.msra.mxu0 0
        %2171 = vmatprep.subr.bf16.mxu0 0
        %2172 = vmatpush1.bf16.msra.mxu0 0
        %2173 = vmatprep.subr.bf16.mxu0 0
        %2174 = vmatpush1.bf16.msra.mxu0 0
        %2175 = vmatprep.mubr.bf16.mxu0 0
        %2176 = vmatmul.mubr.bf16.gmra.mrb[0].mxu0 %v2138
        %v2177 = vpop.f32.mrb[0].mxu0
        %v2178 = vadd.f32 0.0, %v2177
        %v2179 = vpop.f32.mrb[0].mxu0
        %v2180 = vpop.f32.mrb[0].mxu0
        %v2181 = vadd.f32 0.0, %v2180
        %v2182 = vpop.f32.mrb[0].mxu0
        %2183 = vdwg.mxu0
        %v2185 = vsel %vm1129, %v2084, 0
        %v2188 = vsel %vm711, %v2088, 0
        %2190 = vmatprep.subr.bf16.mxu0 0
        %2191 = vmatpush1.bf16.msra.mxu0 %v2188
        %2192 = vmatprep.subr.bf16.mxu0 0
        %2193 = vmatpush1.bf16.msra.mxu0 0
        %2194 = vmatprep.subr.bf16.mxu0 0
        %2195 = vmatpush1.bf16.msra.mxu0 0
        %2196 = vmatprep.subr.bf16.mxu0 0
        %2197 = vmatpush1.bf16.msra.mxu0 0
        %2198 = vmatprep.subr.bf16.mxu0 0
        %2199 = vmatpush1.bf16.msra.mxu0 0
        %2200 = vmatprep.subr.bf16.mxu0 0
        %2201 = vmatpush1.bf16.msra.mxu0 0
        %2202 = vmatprep.subr.bf16.mxu0 0
        %2203 = vmatpush1.bf16.msra.mxu0 0
        %2204 = vmatprep.subr.bf16.mxu0 0
        %2205 = vmatpush1.bf16.msra.mxu0 0
        %2206 = vmatprep.subr.bf16.mxu0 0
        %2207 = vmatpush1.bf16.msra.mxu0 0
        %2208 = vmatprep.subr.bf16.mxu0 0
        %2209 = vmatpush1.bf16.msra.mxu0 0
        %2210 = vmatprep.subr.bf16.mxu0 0
        %2211 = vmatpush1.bf16.msra.mxu0 0
        %2212 = vmatprep.subr.bf16.mxu0 0
        %2213 = vmatpush1.bf16.msra.mxu0 0
        %2214 = vmatprep.subr.bf16.mxu0 0
        %2215 = vmatpush1.bf16.msra.mxu0 0
        %2216 = vmatprep.subr.bf16.mxu0 0
        %2217 = vmatpush1.bf16.msra.mxu0 0
        %2218 = vmatprep.subr.bf16.mxu0 0
        %2219 = vmatpush1.bf16.msra.mxu0 0
        %2220 = vmatprep.subr.bf16.mxu0 0
        %2221 = vmatpush1.bf16.msra.mxu0 0
        %2222 = vmatprep.mubr.bf16.mxu0 0
        %2223 = vmatmul.mubr.bf16.gmra.mrb[0].mxu0 %v2185
        %v2224 = vpop.f32.mrb[0].mxu0
        %v2225 = vadd.f32 0.0, %v2224
        %v2226 = vpop.f32.mrb[0].mxu0
        %v2227 = vpop.f32.mrb[0].mxu0
        %v2228 = vadd.f32 0.0, %v2227
        %v2229 = vpop.f32.mrb[0].mxu0
        %2230 = vdwg.mxu0
        %v2232 = vsel %vm1129, %v2085, 0
        %v2235 = vsel %vm711, %v2089, 0
        %2237 = vmatprep.subr.bf16.mxu0 0
        %2238 = vmatpush1.bf16.msra.mxu0 %v2235
        %2239 = vmatprep.subr.bf16.mxu0 0
        %2240 = vmatpush1.bf16.msra.mxu0 0
        %2241 = vmatprep.subr.bf16.mxu0 0
        %2242 = vmatpush1.bf16.msra.mxu0 0
        %2243 = vmatprep.subr.bf16.mxu0 0
        %2244 = vmatpush1.bf16.msra.mxu0 0
        %2245 = vmatprep.subr.bf16.mxu0 0
        %2246 = vmatpush1.bf16.msra.mxu0 0
        %2247 = vmatprep.subr.bf16.mxu0 0
        %2248 = vmatpush1.bf16.msra.mxu0 0
        %2249 = vmatprep.subr.bf16.mxu0 0
        %2250 = vmatpush1.bf16.msra.mxu0 0
        %2251 = vmatprep.subr.bf16.mxu0 0
        %2252 = vmatpush1.bf16.msra.mxu0 0
        %2253 = vmatprep.subr.bf16.mxu0 0
        %2254 = vmatpush1.bf16.msra.mxu0 0
        %2255 = vmatprep.subr.bf16.mxu0 0
        %2256 = vmatpush1.bf16.msra.mxu0 0
        %2257 = vmatprep.subr.bf16.mxu0 0
        %2258 = vmatpush1.bf16.msra.mxu0 0
        %2259 = vmatprep.subr.bf16.mxu0 0
        %2260 = vmatpush1.bf16.msra.mxu0 0
        %2261 = vmatprep.subr.bf16.mxu0 0
        %2262 = vmatpush1.bf16.msra.mxu0 0
        %2263 = vmatprep.subr.bf16.mxu0 0
        %2264 = vmatpush1.bf16.msra.mxu0 0
        %2265 = vmatprep.subr.bf16.mxu0 0
        %2266 = vmatpush1.bf16.msra.mxu0 0
        %2267 = vmatprep.subr.bf16.mxu0 0
        %2268 = vmatpush1.bf16.msra.mxu0 0
        %2269 = vmatprep.mubr.bf16.mxu0 0
        %2270 = vmatmul.mubr.bf16.gmra.mrb[0].mxu0 %v2232
        %v2271 = vpop.f32.mrb[0].mxu0
        %v2272 = vadd.f32 0.0, %v2271
        %v2273 = vpop.f32.mrb[0].mxu0
        %v2274 = vpop.f32.mrb[0].mxu0
        %v2275 = vadd.f32 0.0, %v2274
        %v2276 = vpop.f32.mrb[0].mxu0
        %2277 = vdwg.mxu0
        %v2278 = vsel %vm1002, %v2131, 0.0
        %v2279 = vsel %vm1002, %v2178, 0.0
        %v2280 = vadd.f32 %v2278, %v2279
        %v2281 = vsel %vm1002, %v2225, 0.0
        %v2282 = vadd.f32 %v2280, %v2281
        %v2283 = vsel %vm1002, %v2272, 0.0
        %v2284 = vadd.f32 %v2282, %v2283
        %v2285 = vsel %vm1002, %v2134, 0.0
        %v2286 = vsel %vm1002, %v2181, 0.0
        %v2287 = vadd.f32 %v2285, %v2286
        %v2288 = vsel %vm1002, %v2228, 0.0
        %v2289 = vadd.f32 %v2287, %v2288
        %v2290 = vsel %vm1002, %v2275, 0.0
        %v2291 = vadd.f32 %v2289, %v2290
        %v2292 = vld [vmem:[%s6] sm:$0x1]
        %v2294 = vlaneseq
        %v2295 = vshrl.u32 %v2294, 7
        %v2296 = vsub.s32 0, %v2295
        %v2297 = vrot.slane %v2292, %v2296
        %v2299 = vadd.f32 %v2284, %v2297
        %v2300 = vadd.f32 %v2291, %v2297
        %v2301 = vadd.f32 %v2299, %v989
        %v2302 = vadd.f32 %v2300, %v990
        %v2303 = vsel %vm1002, %v2301, 0.0
        %2304 = vadd.xlane.f32.xlu0 %v2303
        %v2305 = vpop.xlane.xlu0 %2304
        %v2306 = vsel %vm1002, %v2302, 0.0
        %2307 = vadd.xlane.f32.xlu0 %v2306
        %v2308 = vpop.xlane.xlu0 %2307
        %v2309 = vrcp.pop 32.0
        %v2310 = vmul.f32 %v2305, %v2309
        %v2311 = vmul.f32 %v2308, %v2309
        %v2312 = vsub.f32 %v2301, %v2310
        %v2313 = vsub.f32 %v2302, %v2311
        %v2314 = vmul.f32 %v2312, %v2312
        %v2315 = vmul.f32 %v2313, %v2313
        %v2316 = vsel %vm1002, %v2314, 0.0
        %2317 = vadd.xlane.f32.xlu0 %v2316
        %v2318 = vpop.xlane.xlu0 %2317
        %v2319 = vsel %vm1002, %v2315, 0.0
        %2320 = vadd.xlane.f32.xlu0 %v2319
        %v2321 = vpop.xlane.xlu0 %2320
        %v2322 = vmul.f32 %v2318, %v2309
        %v2323 = vmul.f32 %v2321, %v2309
        %v2324 = vadd.f32 %v2322, 1e-05
        %v2325 = vadd.f32 %v2323, 1e-05
        %v2326 = vrsqrt.pop %v2324
        %v2327 = vrsqrt.pop %v2325
        %v2328 = vmul.f32 %v2312, %v2326
        %v2329 = vmul.f32 %v2313, %v2327
        %v2330 = vld [vmem:[%s7] sm:$0x1]
        %v2332 = vlaneseq
        %v2333 = vshrl.u32 %v2332, 7
        %v2334 = vsub.s32 0, %v2333
        %v2335 = vrot.slane %v2330, %v2334
        %v2337 = vmul.f32 %v2328, %v2335
        %v2338 = vmul.f32 %v2329, %v2335
        %v2339 = vld [vmem:[%s8] sm:$0x1]
        %v2341 = vlaneseq
        %v2342 = vshrl.u32 %v2341, 7
        %v2343 = vsub.s32 0, %v2342
        %v2344 = vrot.slane %v2339, %v2343
        %v2346 = vadd.f32 %v2337, %v2344
        %v2347 = vadd.f32 %v2338, %v2344
        %2348 = vst.msk [vmem:[%s340] sm:$0xff] %vm1002, %v2346
        %2349 = vst.msk [vmem:[%s340 + $0x8] sm:$0xff] %vm1002, %v2347
        %s2350 = sand.u32 %s226, 1
        %s2351 = scalar_lea.sflag [#allocation5], %s2350
        %s2352 = sand.u32 %s226, 1
        %s2353 = smul.addr %s2352, 16
        %s2354 = scalar_lea.vmem [#allocation6], %s2353
        // Predicated region
        $region61: #{tpu_custom_call.1} parent=55 // pred_check
          %p2355 = pneg %p236
        $region62: #{tpu_custom_call.1} parent=55 // pred_check_branch
          %2357 = sbr.rel (%p2355) target = $region64
        $region63: #{tpu_custom_call.1} parent=55 // pred_region
          %s2359 = ssub.s32 256, 256
          %2360 = vsyncadd %s2351, %s2359
          %s2361 = smul.addr %s24, 2
          %s2362 = smul.addr %s2361, 128
          %s2363 = scalar_lea.hbm %s9, %s2362
          %s2364 = sshll.u32 %s2354, 4
          %s2365 = int_to_ptr.vmem [resolvable:$true] %s2364
          %2370 = dma.vmem_to_hbm [thread:$0]  %s2365, 256, %s2363, %s2351, 128, 128, 8
        $region64: #{tpu_custom_call.1} parent=55 // pred_fallthru
          _
      $region56: #{tpu_custom_call.1} parent=5 // pred_fallthru
        _
      %p2371 = scmp.le.s32.totalorder 2, %s19
      // Predicated region
      $region65: #{tpu_custom_call.1} parent=5 // pred_check
        %p2372 = pneg %p2371
      $region66: #{tpu_custom_call.1} parent=5 // pred_check_branch
        %2374 = sbr.rel (%p2372) target = $region68
      $region67: #{tpu_custom_call.1} parent=5 // pred_region
        %s2375 = ssub.s32 %s19, 2
        // Predicated region
        $region69: #{tpu_custom_call.1} parent=67 // pred_check
          %p2376 = pneg %p242
        $region70: #{tpu_custom_call.1} parent=67 // pred_check_branch
          %2378 = sbr.rel (%p2376) target = $region72
        $region71: #{tpu_custom_call.1} parent=67 // pred_region
          %s2379 = sand.u32 %s227, 1
          %s2380 = scalar_lea.sflag [#allocation5], %s2379
          %s2381 = sand.u32 %s227, 1
          %s2382 = smul.addr %s2381, 16
          %s2383 = scalar_lea.vmem [#allocation6], %s2382
          %2384 = dma.done %s2380, 256
        $region72: #{tpu_custom_call.1} parent=67 // pred_fallthru
          _
      $region68: #{tpu_custom_call.1} parent=5 // pred_fallthru
        _
    $region6: #{tpu_custom_call.1} parent=1 // loop_footer
      %s23 = sadd.s32 1, %s19
    $region7: #{tpu_custom_call.1} parent=1 // loop_footer_branch
      %18 = sbr.rel target = $region3
    $region8: #{tpu_custom_call.1} parent=1 // loop_exit
      _
    %2385 = vsyncpa [#allocation4], 1
    %s2386 = scalar_lea.sflag [#allocation4], 1
    %2387 = vsyncpa %s2386, 1
    %2388 = vsyncpa [#allocation5], 1
    %s2389 = scalar_lea.sflag [#allocation5], 1
    %2390 = vsyncpa %s2389, 1

</llo_original>
